<compile_context>
chip_gen: v7x
topology: tpu7x:2x2x1
jax: 0.10.0
libtpu: 0.0.40
codegen_flags: <defaults>
</compile_context>

<pallas_src>
import jax
import jax.numpy as jnp
from jax.experimental import pallas as pl
from jax.experimental.pallas import tpu as pltpu


def deepset_encoder2_kernel(states_ref, we_ref, be_ref, wo_ref, bo_ref, out_ref):
    TB, N, H = states_ref.shape
    n_emb = we_ref.shape[0]
    n_out = wo_ref.shape[0]

    x3 = states_ref[...]                       # (TB, N, H) f32
    x = x3.reshape(TB * N, H)                  # lane-dense 2-D MXU operand (free reshape)

    # Embedding layers: y = xW + b ; x = relu(max_over_set(y) - y)
    for l in range(n_emb):                     # static unroll (4 layers)
        y = jnp.dot(x, we_ref[l], preferred_element_type=jnp.float32) + be_ref[l]
        y3 = y.reshape(TB, N, H)
        m = jnp.max(y3, axis=1, keepdims=True)             # (TB, 1, H) sublane reduce
        x3 = jnp.maximum(m - y3, 0.0)                       # relu(max - y)
        x = x3.reshape(TB * N, H)

    pooled = jnp.max(x3, axis=1)               # (TB, H)

    # Output layers: pooled = relu(pooled W + b)
    for l in range(n_out):                     # static unroll (3 layers)
        pooled = jnp.maximum(
            jnp.dot(pooled, wo_ref[l], preferred_element_type=jnp.float32)
            + bo_ref[l], 0.0)

    out_ref[...] = pooled.astype(out_ref.dtype)             # (TB, H) unmasked stores


def deepset_encoder2(states, w_emb_t, b_emb, w_out_t, b_out, *, block_b=8):
    """states: (B, N, H) or list of N arrays (B, H); weights pre-transposed to (in, out).

    w_emb_t: (L_emb, H, H), b_emb: (L_emb, 1, H), w_out_t: (L_out, H, H),
    b_out: (L_out, 1, H).  Returns (B, H).
    """
    if isinstance(states, (list, tuple)):
        states = jnp.stack(states, axis=1)     # mirrors torch.stack(states, dim=1)
    B, N, H = states.shape
    L_E = w_emb_t.shape[0]
    L_O = w_out_t.shape[0]
    assert B % block_b == 0, "batch must be a multiple of the block size"
    grid = (B // block_b,)

    flops = 2 * B * N * H * H * L_E + 2 * B * H * H * L_O
    bytes_accessed = 4 * (states.size + w_emb_t.size + b_emb.size
                          + w_out_t.size + b_out.size + B * H)
    cost = pl.CostEstimate(flops=flops, transcendentals=0,
                           bytes_accessed=bytes_accessed)

    return pl.pallas_call(
        deepset_encoder2_kernel,
        out_shape=jax.ShapeDtypeStruct((B, H), jnp.float32),
        grid=grid,
        in_specs=[
            pl.BlockSpec((block_b, N, H), lambda i: (i, 0, 0)),   # per-block states
            pl.BlockSpec((L_E, H, H), lambda i: (0, 0, 0)),       # weights resident
            pl.BlockSpec((L_E, 1, H), lambda i: (0, 0, 0)),       # biases resident
            pl.BlockSpec((L_O, H, H), lambda i: (0, 0, 0)),
            pl.BlockSpec((L_O, 1, H), lambda i: (0, 0, 0)),
        ],
        out_specs=pl.BlockSpec((block_b, H), lambda i: (i, 0)),
        compiler_params=pltpu.CompilerParams(
            dimension_semantics=("parallel",)),
        cost_estimate=cost,
    )(states, w_emb_t, b_emb, w_out_t, b_out)


def deepset_encoder2_ref(states, w_emb_t, b_emb, w_out_t, b_out):
    """Pure-JAX reference mirroring the PyTorch forward."""
    x = states                                   # (B, N, H)
    for l in range(w_emb_t.shape[0]):
        y = jnp.einsum('bnh,hk->bnk', x, w_emb_t[l]) + b_emb[l]
        m = jnp.max(y, axis=1, keepdims=True)
        x = jax.nn.relu(m - y)
    pooled = jnp.max(x, axis=1)                  # (B, H)
    for l in range(w_out_t.shape[0]):
        pooled = jax.nn.relu(pooled @ w_out_t[l] + b_out[l])
    return pooled


if __name__ == "__main__":
    H = 128          # hidden_dim (module default; keeps operands lane-dense)
    N = 8            # set size (number of stacked states)
    B = 16           # batch rows; block_b=8 -> grid of 2 blocks
    L_E, L_O = 4, 3  # num_embedding_layers, num_output_layers

    key = jax.random.PRNGKey(0)
    ks = jax.random.split(key, 1 + 2 * (L_E + L_O))

    states = jax.random.normal(ks[0], (B, N, H), dtype=jnp.float32)

    bound = 1.0 / float(H) ** 0.5

    def init_linear(kw, kb):
        w_t = jax.random.uniform(kw, (H, H), jnp.float32, -bound, bound)   # (in, out)
        b = jax.random.uniform(kb, (1, H), jnp.float32, -bound, bound)
        return w_t, b

    w_emb, b_emb = [], []
    for l in range(L_E):
        w, b = init_linear(ks[1 + 2 * l], ks[2 + 2 * l])
        w_emb.append(w); b_emb.append(b)
    w_out, b_out = [], []
    off = 1 + 2 * L_E
    for l in range(L_O):
        w, b = init_linear(ks[off + 2 * l], ks[off + 1 + 2 * l])
        w_out.append(w); b_out.append(b)

    w_emb_t = jnp.stack(w_emb)    # (L_E, H, H)
    b_emb_s = jnp.stack(b_emb)    # (L_E, 1, H)
    w_out_t = jnp.stack(w_out)    # (L_O, H, H)
    b_out_s = jnp.stack(b_out)    # (L_O, 1, H)

    out = deepset_encoder2(states, w_emb_t, b_emb_s, w_out_t, b_out_s, block_b=8)
    out = jax.block_until_ready(out)

    ref = deepset_encoder2_ref(states, w_emb_t, b_emb_s, w_out_t, b_out_s)
    assert out.shape == (B, H)
    assert jnp.allclose(out, ref, atol=1e-4, rtol=1e-4), "mismatch vs reference"

    print("KERNEL_OK")
</pallas_src>

<mosaic_0001>
module attributes {stable_mosaic.version = 11 : i64} {
  func.func @deepset_encoder2_kernel(%arg0: i32, %arg1: memref<8x8x128xf32, #tpu.memory_space<vmem>>, %arg2: memref<4x128x128xf32, #tpu.memory_space<vmem>>, %arg3: memref<4x1x128xf32, #tpu.memory_space<vmem>>, %arg4: memref<3x128x128xf32, #tpu.memory_space<vmem>>, %arg5: memref<3x1x128xf32, #tpu.memory_space<vmem>>, %arg6: memref<8x128xf32, #tpu.memory_space<vmem>>) attributes {dimension_semantics = [#tpu.dimension_semantics<parallel>], iteration_bounds = array<i64: 2>, scalar_prefetch = 0 : i64, scratch_operands = 0 : i64, tpu.core_type = #tpu.core_type<tc>, window_params = [{transform_indices = @transform_0, window_bounds = array<i64: 8, 8, 128>}, {pipeline_mode = #tpu.pipeline_mode<synchronous>, transform_indices = @transform_1, window_bounds = array<i64: 4, 128, 128>}, {pipeline_mode = #tpu.pipeline_mode<synchronous>, transform_indices = @transform_2, window_bounds = array<i64: 4, 1, 128>}, {pipeline_mode = #tpu.pipeline_mode<synchronous>, transform_indices = @transform_3, window_bounds = array<i64: 3, 128, 128>}, {pipeline_mode = #tpu.pipeline_mode<synchronous>, transform_indices = @transform_4, window_bounds = array<i64: 3, 1, 128>}, {transform_indices = @transform_5, window_bounds = array<i64: 8, 128>}]} {
    %c0 = arith.constant 0 : index
    %c0_0 = arith.constant 0 : index
    %c0_1 = arith.constant 0 : index
    %0 = vector.load %arg1[%c0, %c0_0, %c0_1] : memref<8x8x128xf32, #tpu.memory_space<vmem>>, vector<8x8x128xf32>
    %1 = vector.shape_cast %0 : vector<8x8x128xf32> to vector<64x128xf32>
    %c0_2 = arith.constant 0 : index
    %c0_3 = arith.constant 0 : index
    %c0_4 = arith.constant 0 : index
    %2 = vector.load %arg2[%c0_2, %c0_3, %c0_4] : memref<4x128x128xf32, #tpu.memory_space<vmem>>, vector<1x128x128xf32>
    %3 = vector.shape_cast %2 : vector<1x128x128xf32> to vector<128x128xf32>
    %cst = arith.constant dense<0.000000e+00> : vector<64x128xf32>
    %4 = tpu.matmul %1, %3, %cst {dimension_numbers = #tpu.dot_dimension_numbers<[1], [0], [0], [1], [0, 0, 1, 1], [], []>} : vector<64x128xf32>, vector<128x128xf32>, vector<64x128xf32> -> vector<64x128xf32>
    %c0_5 = arith.constant 0 : index
    %c0_6 = arith.constant 0 : index
    %c0_7 = arith.constant 0 : index
    %5 = vector.load %arg3[%c0_5, %c0_6, %c0_7] : memref<4x1x128xf32, #tpu.memory_space<vmem>>, vector<1x1x128xf32>
    %6 = vector.shape_cast %5 : vector<1x1x128xf32> to vector<1x128xf32>
    %7 = vector.broadcast %6 : vector<1x128xf32> to vector<64x128xf32>
    %8 = arith.addf %4, %7 : vector<64x128xf32>
    %9 = vector.shape_cast %8 : vector<64x128xf32> to vector<8x8x128xf32>
    %cst_8 = arith.constant dense<0xFF800000> : vector<8x128xf32>
    %10 = vector.multi_reduction <maximumf>, %9, %cst_8 [1] : vector<8x8x128xf32> to vector<8x128xf32>
    %11 = vector.shape_cast %10 : vector<8x128xf32> to vector<8x1x128xf32>
    %12 = vector.broadcast %11 : vector<8x1x128xf32> to vector<8x8x128xf32>
    %13 = arith.subf %12, %9 : vector<8x8x128xf32>
    %cst_9 = arith.constant 0.000000e+00 : f32
    %14 = vector.broadcast %cst_9 : f32 to vector<8x8x128xf32>
    %15 = arith.maximumf %13, %14 : vector<8x8x128xf32>
    %16 = vector.shape_cast %15 : vector<8x8x128xf32> to vector<64x128xf32>
    %c1 = arith.constant 1 : index
    %c0_10 = arith.constant 0 : index
    %c0_11 = arith.constant 0 : index
    %17 = vector.load %arg2[%c1, %c0_10, %c0_11] : memref<4x128x128xf32, #tpu.memory_space<vmem>>, vector<1x128x128xf32>
    %18 = vector.shape_cast %17 : vector<1x128x128xf32> to vector<128x128xf32>
    %cst_12 = arith.constant dense<0.000000e+00> : vector<64x128xf32>
    %19 = tpu.matmul %16, %18, %cst_12 {dimension_numbers = #tpu.dot_dimension_numbers<[1], [0], [0], [1], [0, 0, 1, 1], [], []>} : vector<64x128xf32>, vector<128x128xf32>, vector<64x128xf32> -> vector<64x128xf32>
    %c1_13 = arith.constant 1 : index
    %c0_14 = arith.constant 0 : index
    %c0_15 = arith.constant 0 : index
    %20 = vector.load %arg3[%c1_13, %c0_14, %c0_15] : memref<4x1x128xf32, #tpu.memory_space<vmem>>, vector<1x1x128xf32>
    %21 = vector.shape_cast %20 : vector<1x1x128xf32> to vector<1x128xf32>
    %22 = vector.broadcast %21 : vector<1x128xf32> to vector<64x128xf32>
    %23 = arith.addf %19, %22 : vector<64x128xf32>
    %24 = vector.shape_cast %23 : vector<64x128xf32> to vector<8x8x128xf32>
    %cst_16 = arith.constant dense<0xFF800000> : vector<8x128xf32>
    %25 = vector.multi_reduction <maximumf>, %24, %cst_16 [1] : vector<8x8x128xf32> to vector<8x128xf32>
    %26 = vector.shape_cast %25 : vector<8x128xf32> to vector<8x1x128xf32>
    %27 = vector.broadcast %26 : vector<8x1x128xf32> to vector<8x8x128xf32>
    %28 = arith.subf %27, %24 : vector<8x8x128xf32>
    %cst_17 = arith.constant 0.000000e+00 : f32
    %29 = vector.broadcast %cst_17 : f32 to vector<8x8x128xf32>
    %30 = arith.maximumf %28, %29 : vector<8x8x128xf32>
    %31 = vector.shape_cast %30 : vector<8x8x128xf32> to vector<64x128xf32>
    %c2 = arith.constant 2 : index
    %c0_18 = arith.constant 0 : index
    %c0_19 = arith.constant 0 : index
    %32 = vector.load %arg2[%c2, %c0_18, %c0_19] : memref<4x128x128xf32, #tpu.memory_space<vmem>>, vector<1x128x128xf32>
    %33 = vector.shape_cast %32 : vector<1x128x128xf32> to vector<128x128xf32>
    %cst_20 = arith.constant dense<0.000000e+00> : vector<64x128xf32>
    %34 = tpu.matmul %31, %33, %cst_20 {dimension_numbers = #tpu.dot_dimension_numbers<[1], [0], [0], [1], [0, 0, 1, 1], [], []>} : vector<64x128xf32>, vector<128x128xf32>, vector<64x128xf32> -> vector<64x128xf32>
    %c2_21 = arith.constant 2 : index
    %c0_22 = arith.constant 0 : index
    %c0_23 = arith.constant 0 : index
    %35 = vector.load %arg3[%c2_21, %c0_22, %c0_23] : memref<4x1x128xf32, #tpu.memory_space<vmem>>, vector<1x1x128xf32>
    %36 = vector.shape_cast %35 : vector<1x1x128xf32> to vector<1x128xf32>
    %37 = vector.broadcast %36 : vector<1x128xf32> to vector<64x128xf32>
    %38 = arith.addf %34, %37 : vector<64x128xf32>
    %39 = vector.shape_cast %38 : vector<64x128xf32> to vector<8x8x128xf32>
    %cst_24 = arith.constant dense<0xFF800000> : vector<8x128xf32>
    %40 = vector.multi_reduction <maximumf>, %39, %cst_24 [1] : vector<8x8x128xf32> to vector<8x128xf32>
    %41 = vector.shape_cast %40 : vector<8x128xf32> to vector<8x1x128xf32>
    %42 = vector.broadcast %41 : vector<8x1x128xf32> to vector<8x8x128xf32>
    %43 = arith.subf %42, %39 : vector<8x8x128xf32>
    %cst_25 = arith.constant 0.000000e+00 : f32
    %44 = vector.broadcast %cst_25 : f32 to vector<8x8x128xf32>
    %45 = arith.maximumf %43, %44 : vector<8x8x128xf32>
    %46 = vector.shape_cast %45 : vector<8x8x128xf32> to vector<64x128xf32>
    %c3 = arith.constant 3 : index
    %c0_26 = arith.constant 0 : index
    %c0_27 = arith.constant 0 : index
    %47 = vector.load %arg2[%c3, %c0_26, %c0_27] : memref<4x128x128xf32, #tpu.memory_space<vmem>>, vector<1x128x128xf32>
    %48 = vector.shape_cast %47 : vector<1x128x128xf32> to vector<128x128xf32>
    %cst_28 = arith.constant dense<0.000000e+00> : vector<64x128xf32>
    %49 = tpu.matmul %46, %48, %cst_28 {dimension_numbers = #tpu.dot_dimension_numbers<[1], [0], [0], [1], [0, 0, 1, 1], [], []>} : vector<64x128xf32>, vector<128x128xf32>, vector<64x128xf32> -> vector<64x128xf32>
    %c3_29 = arith.constant 3 : index
    %c0_30 = arith.constant 0 : index
    %c0_31 = arith.constant 0 : index
    %50 = vector.load %arg3[%c3_29, %c0_30, %c0_31] : memref<4x1x128xf32, #tpu.memory_space<vmem>>, vector<1x1x128xf32>
    %51 = vector.shape_cast %50 : vector<1x1x128xf32> to vector<1x128xf32>
    %52 = vector.broadcast %51 : vector<1x128xf32> to vector<64x128xf32>
    %53 = arith.addf %49, %52 : vector<64x128xf32>
    %54 = vector.shape_cast %53 : vector<64x128xf32> to vector<8x8x128xf32>
    %cst_32 = arith.constant dense<0xFF800000> : vector<8x128xf32>
    %55 = vector.multi_reduction <maximumf>, %54, %cst_32 [1] : vector<8x8x128xf32> to vector<8x128xf32>
    %56 = vector.shape_cast %55 : vector<8x128xf32> to vector<8x1x128xf32>
    %57 = vector.broadcast %56 : vector<8x1x128xf32> to vector<8x8x128xf32>
    %58 = arith.subf %57, %54 : vector<8x8x128xf32>
    %cst_33 = arith.constant 0.000000e+00 : f32
    %59 = vector.broadcast %cst_33 : f32 to vector<8x8x128xf32>
    %60 = arith.maximumf %58, %59 : vector<8x8x128xf32>
    %cst_34 = arith.constant dense<0xFF800000> : vector<8x128xf32>
    %61 = vector.multi_reduction <maximumf>, %60, %cst_34 [1] : vector<8x8x128xf32> to vector<8x128xf32>
    %c0_35 = arith.constant 0 : index
    %c0_36 = arith.constant 0 : index
    %c0_37 = arith.constant 0 : index
    %62 = vector.load %arg4[%c0_35, %c0_36, %c0_37] : memref<3x128x128xf32, #tpu.memory_space<vmem>>, vector<1x128x128xf32>
    %63 = vector.shape_cast %62 : vector<1x128x128xf32> to vector<128x128xf32>
    %cst_38 = arith.constant dense<0.000000e+00> : vector<8x128xf32>
    %64 = tpu.matmul %61, %63, %cst_38 {dimension_numbers = #tpu.dot_dimension_numbers<[1], [0], [0], [1], [0, 0, 1, 1], [], []>} : vector<8x128xf32>, vector<128x128xf32>, vector<8x128xf32> -> vector<8x128xf32>
    %c0_39 = arith.constant 0 : index
    %c0_40 = arith.constant 0 : index
    %c0_41 = arith.constant 0 : index
    %65 = vector.load %arg5[%c0_39, %c0_40, %c0_41] : memref<3x1x128xf32, #tpu.memory_space<vmem>>, vector<1x1x128xf32>
    %66 = vector.shape_cast %65 : vector<1x1x128xf32> to vector<1x128xf32>
    %67 = vector.broadcast %66 : vector<1x128xf32> to vector<8x128xf32>
    %68 = arith.addf %64, %67 : vector<8x128xf32>
    %cst_42 = arith.constant 0.000000e+00 : f32
    %69 = vector.broadcast %cst_42 : f32 to vector<8x128xf32>
    %70 = arith.maximumf %68, %69 : vector<8x128xf32>
    %c1_43 = arith.constant 1 : index
    %c0_44 = arith.constant 0 : index
    %c0_45 = arith.constant 0 : index
    %71 = vector.load %arg4[%c1_43, %c0_44, %c0_45] : memref<3x128x128xf32, #tpu.memory_space<vmem>>, vector<1x128x128xf32>
    %72 = vector.shape_cast %71 : vector<1x128x128xf32> to vector<128x128xf32>
    %cst_46 = arith.constant dense<0.000000e+00> : vector<8x128xf32>
    %73 = tpu.matmul %70, %72, %cst_46 {dimension_numbers = #tpu.dot_dimension_numbers<[1], [0], [0], [1], [0, 0, 1, 1], [], []>} : vector<8x128xf32>, vector<128x128xf32>, vector<8x128xf32> -> vector<8x128xf32>
    %c1_47 = arith.constant 1 : index
    %c0_48 = arith.constant 0 : index
    %c0_49 = arith.constant 0 : index
    %74 = vector.load %arg5[%c1_47, %c0_48, %c0_49] : memref<3x1x128xf32, #tpu.memory_space<vmem>>, vector<1x1x128xf32>
    %75 = vector.shape_cast %74 : vector<1x1x128xf32> to vector<1x128xf32>
    %76 = vector.broadcast %75 : vector<1x128xf32> to vector<8x128xf32>
    %77 = arith.addf %73, %76 : vector<8x128xf32>
    %cst_50 = arith.constant 0.000000e+00 : f32
    %78 = vector.broadcast %cst_50 : f32 to vector<8x128xf32>
    %79 = arith.maximumf %77, %78 : vector<8x128xf32>
    %c2_51 = arith.constant 2 : index
    %c0_52 = arith.constant 0 : index
    %c0_53 = arith.constant 0 : index
    %80 = vector.load %arg4[%c2_51, %c0_52, %c0_53] : memref<3x128x128xf32, #tpu.memory_space<vmem>>, vector<1x128x128xf32>
    %81 = vector.shape_cast %80 : vector<1x128x128xf32> to vector<128x128xf32>
    %cst_54 = arith.constant dense<0.000000e+00> : vector<8x128xf32>
    %82 = tpu.matmul %79, %81, %cst_54 {dimension_numbers = #tpu.dot_dimension_numbers<[1], [0], [0], [1], [0, 0, 1, 1], [], []>} : vector<8x128xf32>, vector<128x128xf32>, vector<8x128xf32> -> vector<8x128xf32>
    %c2_55 = arith.constant 2 : index
    %c0_56 = arith.constant 0 : index
    %c0_57 = arith.constant 0 : index
    %83 = vector.load %arg5[%c2_55, %c0_56, %c0_57] : memref<3x1x128xf32, #tpu.memory_space<vmem>>, vector<1x1x128xf32>
    %84 = vector.shape_cast %83 : vector<1x1x128xf32> to vector<1x128xf32>
    %85 = vector.broadcast %84 : vector<1x128xf32> to vector<8x128xf32>
    %86 = arith.addf %82, %85 : vector<8x128xf32>
    %cst_58 = arith.constant 0.000000e+00 : f32
    %87 = vector.broadcast %cst_58 : f32 to vector<8x128xf32>
    %88 = arith.maximumf %86, %87 : vector<8x128xf32>
    %c0_59 = arith.constant 0 : index
    %c0_60 = arith.constant 0 : index
    %89 = vector.load %arg6[%c0_59, %c0_60] : memref<8x128xf32, #tpu.memory_space<vmem>>, vector<8x128xf32>
    tpu.vector_store %arg6[%c0_59, %c0_60], %88 {strides = array<i32>} : memref<8x128xf32, #tpu.memory_space<vmem>>, vector<8x128xf32>,
    return
  }
  func.func @transform_0(%arg0: i32) -> (i32, i32, i32) {
    %c0_i32 = arith.constant 0 : i32
    %c0_i32_0 = arith.constant 0 : i32
    %c0_i32_1 = arith.constant 0 : i32
    return %arg0, %c0_i32, %c0_i32_0 : i32, i32, i32
  }
  func.func @transform_1(%arg0: i32) -> (i32, i32, i32) {
    %c0_i32 = arith.constant 0 : i32
    %c0_i32_0 = arith.constant 0 : i32
    %c0_i32_1 = arith.constant 0 : i32
    %c0_i32_2 = arith.constant 0 : i32
    return %c0_i32, %c0_i32_0, %c0_i32_1 : i32, i32, i32
  }
  func.func @transform_2(%arg0: i32) -> (i32, i32, i32) {
    %c0_i32 = arith.constant 0 : i32
    %c0_i32_0 = arith.constant 0 : i32
    %c0_i32_1 = arith.constant 0 : i32
    %c0_i32_2 = arith.constant 0 : i32
    return %c0_i32, %c0_i32_0, %c0_i32_1 : i32, i32, i32
  }
  func.func @transform_3(%arg0: i32) -> (i32, i32, i32) {
    %c0_i32 = arith.constant 0 : i32
    %c0_i32_0 = arith.constant 0 : i32
    %c0_i32_1 = arith.constant 0 : i32
    %c0_i32_2 = arith.constant 0 : i32
    return %c0_i32, %c0_i32_0, %c0_i32_1 : i32, i32, i32
  }
  func.func @transform_4(%arg0: i32) -> (i32, i32, i32) {
    %c0_i32 = arith.constant 0 : i32
    %c0_i32_0 = arith.constant 0 : i32
    %c0_i32_1 = arith.constant 0 : i32
    %c0_i32_2 = arith.constant 0 : i32
    return %c0_i32, %c0_i32_0, %c0_i32_1 : i32, i32, i32
  }
  func.func @transform_5(%arg0: i32) -> (i32, i32) {
    %c0_i32 = arith.constant 0 : i32
    %c0_i32_0 = arith.constant 0 : i32
    return %arg0, %c0_i32 : i32, i32
  }
}

</mosaic_0001>

<llo_original>
// kernel: tpu_custom_call.1
$region0: #{tpu_custom_call.1}
  #allocation0 [shape = 'u32[]', space=smem, size = 0x4, offset = 0x4, fixed_abs, tag = 'smem constant byte address 0x4 - core index']
  #allocation1 [shape = 'u32[144,128]{1,0:T(1,128)}', space=vmem, size = 0x12000, scoped, tag = 'internal scratch']
  %s0 = inlined_call_operand.hbm [shape: f32[16,8,128], index: 0, kind: input, shape index: {}]
  %s1 = inlined_call_operand.hbm [shape: f32[4,128,128], index: 1, kind: input, shape index: {}]
  %s2 = inlined_call_operand.vmem [shape: f32[4,1,128], index: 2, kind: input, shape index: {}]
  %s3 = inlined_call_operand.hbm [shape: f32[3,128,128], index: 3, kind: input, shape index: {}]
  %s4 = inlined_call_operand.vmem [shape: f32[3,1,128], index: 4, kind: input, shape index: {}]
  %s5 = inlined_call_operand.hbm [shape: f32[16,128], index: 5, kind: output, shape index: {}]
  %s6 = sld [smem:[#allocation0]]
  $region65: #{tpu_custom_call.1} parent=0
    _
  %s8 = ssub.s32 1, %s6
  %s9 = scalar_select 0, %s8, %s6
  $region1: #{tpu_custom_call.1} parent=0
    #allocation2 [shape = 'u8[65536]{0}', space=vmem, size = 0x10000, scoped, tag = 'input window, operand 0']
    #allocation3 [shape = 's32[2]{0}', space=sflag, size = 0x8, scoped, tag = 'scoped memory for tpu_custom_call.1']
    #allocation4 [shape = 's32[2]{0}', space=sflag, size = 0x8, scoped, tag = 'scoped memory for tpu_custom_call.1']
    #allocation5 [shape = 'u8[262144]{0}', space=vmem, size = 0x40000, scoped, tag = 'input window, operand 1, single buffered']
    #allocation6 [shape = 's32[1]{0}', space=sflag, size = 0x4, scoped, tag = 'scoped memory for tpu_custom_call.1']
    #allocation7 [shape = 'u8[196608]{0}', space=vmem, size = 0x30000, scoped, tag = 'input window, operand 3, single buffered']
    #allocation8 [shape = 'u8[8192]{0}', space=vmem, size = 0x2000, scoped, tag = 'output window, operand 0']
    %10 = vsyncpa [#allocation3], 0
    %s11 = scalar_lea.sflag [#allocation3], 1
    %12 = vsyncpa %s11, 0
    %13 = vsyncpa [#allocation6], 0
    %14 = vsyncpa [#allocation4], 0
    %s15 = scalar_lea.sflag [#allocation4], 1
    %16 = vsyncpa %s15, 0
    loop: start=0, step=1, limit=4
    $region2: #{tpu_custom_call.1} parent=1 // loop_pre_header
      _
    $region3: #{tpu_custom_call.1} parent=1 // loop_header
      %s18 = sphi 0, %s22
      %p19 = scmp.ge.s32.totalorder %s18, 4
      %s28 = sphi 0, %s30
      %s31 = sphi 0, %s28
      %s32 = sphi 0, %s31
      %s48 = sphi 0, %s32
      %s52 = sphi 0, %s52
      %s54 = sphi 0, %s52
      %s55 = sphi 0, %s54
      %s69 = sphi 0, %s55
      %s73 = sphi 0, %s73
      %s75 = sphi 0, %s73
      %s76 = sphi 0, %s75
      %s90 = sphi 0, %s76
      %s94 = sphi 0, %s94
      %s96 = sphi 0, %s94
      %s97 = sphi 0, %s96
      %s111 = sphi 0, %s97
      %s115 = sphi 0, %s115
      %s117 = sphi 0, %s115
      %s118 = sphi 0, %s117
      %s132 = sphi 0, %s118
      %s138 = sphi 0, %s140
      %s141 = sphi 0, %s138
      %s142 = sphi 0, %s141
      %s158 = sphi 0, %s142
    $region4: #{tpu_custom_call.1} parent=1 // loop_header_branch
      %21 = sbr.rel (%p19) target = $region8
    $region5: #{tpu_custom_call.1} parent=1 // loop_body
      %s23 = ssub.s32 %s18, 1
      %s24 = ssub.s32 %s18, 2
      %s25 = sadd.s32 %s18, 1
      %s26 = ssub.s32 %s18, %s25
      %p27 = scmp.eq.s32.totalorder %s26, 0
      %s29 = sadd.s32 %s28, 1
      %s30 = scalar_select %p27, %s28, %s29
      %p33 = pneg %p27
      %p34 = scmp.eq.s32.totalorder %s18, 1
      %p35 = por %p33, %p34
      %p36 = scmp.ne.s32.totalorder %s28, %s31
      %p37 = scmp.eq.s32.totalorder %s18, 0
      %p38 = por %p36, %p37
      %p39 = scmp.ne.s32.totalorder %s28, %s31
      %p40 = scmp.eq.s32.totalorder %s23, 1
      %p41 = por %p39, %p40
      %p42 = scmp.ne.s32.totalorder %s31, %s32
      %p43 = scmp.eq.s32.totalorder %s23, 0
      %p44 = por %p42, %p43
      %p45 = scmp.ne.s32.totalorder %s31, %s32
      %p46 = scmp.eq.s32.totalorder %s24, 1
      %p47 = por %p45, %p46
      %p49 = scmp.ne.s32.totalorder %s32, %s48
      %p50 = scmp.eq.s32.totalorder %s24, 0
      %p51 = por %p49, %p50
      %s53 = sadd.s32 %s52, 1
      %p56 = scmp.eq.s32.totalorder %s18, 1
      %p57 = scmp.ne.s32.totalorder %s52, %s54
      %p58 = scmp.eq.s32.totalorder %s18, 0
      %p59 = por %p57, %p58
      %p60 = scmp.ne.s32.totalorder %s52, %s54
      %p61 = scmp.eq.s32.totalorder %s23, 1
      %p62 = por %p60, %p61
      %p63 = scmp.ne.s32.totalorder %s54, %s55
      %p64 = scmp.eq.s32.totalorder %s23, 0
      %p65 = por %p63, %p64
      %p66 = scmp.ne.s32.totalorder %s54, %s55
      %p67 = scmp.eq.s32.totalorder %s24, 1
      %p68 = por %p66, %p67
      %p70 = scmp.ne.s32.totalorder %s55, %s69
      %p71 = scmp.eq.s32.totalorder %s24, 0
      %p72 = por %p70, %p71
      %s74 = sadd.s32 %s73, 1
      %p77 = scmp.eq.s32.totalorder %s18, 1
      %p78 = scmp.ne.s32.totalorder %s73, %s75
      %p79 = scmp.eq.s32.totalorder %s18, 0
      %p80 = por %p78, %p79
      %p81 = scmp.ne.s32.totalorder %s73, %s75
      %p82 = scmp.eq.s32.totalorder %s23, 1
      %p83 = por %p81, %p82
      %p84 = scmp.ne.s32.totalorder %s75, %s76
      %p85 = scmp.eq.s32.totalorder %s23, 0
      %p86 = por %p84, %p85
      %p87 = scmp.ne.s32.totalorder %s75, %s76
      %p88 = scmp.eq.s32.totalorder %s24, 1
      %p89 = por %p87, %p88
      %p91 = scmp.ne.s32.totalorder %s76, %s90
      %p92 = scmp.eq.s32.totalorder %s24, 0
      %p93 = por %p91, %p92
      %s95 = sadd.s32 %s94, 1
      %p98 = scmp.eq.s32.totalorder %s18, 1
      %p99 = scmp.ne.s32.totalorder %s94, %s96
      %p100 = scmp.eq.s32.totalorder %s18, 0
      %p101 = por %p99, %p100
      %p102 = scmp.ne.s32.totalorder %s94, %s96
      %p103 = scmp.eq.s32.totalorder %s23, 1
      %p104 = por %p102, %p103
      %p105 = scmp.ne.s32.totalorder %s96, %s97
      %p106 = scmp.eq.s32.totalorder %s23, 0
      %p107 = por %p105, %p106
      %p108 = scmp.ne.s32.totalorder %s96, %s97
      %p109 = scmp.eq.s32.totalorder %s24, 1
      %p110 = por %p108, %p109
      %p112 = scmp.ne.s32.totalorder %s97, %s111
      %p113 = scmp.eq.s32.totalorder %s24, 0
      %p114 = por %p112, %p113
      %s116 = sadd.s32 %s115, 1
      %p119 = scmp.eq.s32.totalorder %s18, 1
      %p120 = scmp.ne.s32.totalorder %s115, %s117
      %p121 = scmp.eq.s32.totalorder %s18, 0
      %p122 = por %p120, %p121
      %p123 = scmp.ne.s32.totalorder %s115, %s117
      %p124 = scmp.eq.s32.totalorder %s23, 1
      %p125 = por %p123, %p124
      %p126 = scmp.ne.s32.totalorder %s117, %s118
      %p127 = scmp.eq.s32.totalorder %s23, 0
      %p128 = por %p126, %p127
      %p129 = scmp.ne.s32.totalorder %s117, %s118
      %p130 = scmp.eq.s32.totalorder %s24, 1
      %p131 = por %p129, %p130
      %p133 = scmp.ne.s32.totalorder %s118, %s132
      %p134 = scmp.eq.s32.totalorder %s24, 0
      %p135 = por %p133, %p134
      %s136 = ssub.s32 %s18, %s25
      %p137 = scmp.eq.s32.totalorder %s136, 0
      %s139 = sadd.s32 %s138, 1
      %s140 = scalar_select %p137, %s138, %s139
      %p143 = pneg %p137
      %p144 = scmp.eq.s32.totalorder %s18, 1
      %p145 = por %p143, %p144
      %p146 = scmp.ne.s32.totalorder %s138, %s141
      %p147 = scmp.eq.s32.totalorder %s18, 0
      %p148 = por %p146, %p147
      %p149 = scmp.ne.s32.totalorder %s138, %s141
      %p150 = scmp.eq.s32.totalorder %s23, 1
      %p151 = por %p149, %p150
      %p152 = scmp.ne.s32.totalorder %s141, %s142
      %p153 = scmp.eq.s32.totalorder %s23, 0
      %p154 = por %p152, %p153
      %p155 = scmp.ne.s32.totalorder %s141, %s142
      %p156 = scmp.eq.s32.totalorder %s24, 1
      %p157 = por %p155, %p156
      %p159 = scmp.ne.s32.totalorder %s142, %s158
      %p160 = scmp.eq.s32.totalorder %s24, 0
      %p161 = por %p159, %p160
      %p162 = scmp.le.s32.totalorder 1, %s18
      %p163 = scmp.lt.s32.totalorder %s18, 3
      %p164 = pnand %p162, %p163
      %p165 = pneg %p164
      // Predicated region
      $region9: #{tpu_custom_call.1} parent=5 // pred_check
        _
      $region10: #{tpu_custom_call.1} parent=5 // pred_check_branch
        %167 = sbr.rel (%p164) target = $region12
      $region11: #{tpu_custom_call.1} parent=5 // pred_region
        %s168 = ssub.s32 %s18, 1
        // Predicated region
        $region13: #{tpu_custom_call.1} parent=11 // pred_check
          %p169 = pneg %p65
        $region14: #{tpu_custom_call.1} parent=11 // pred_check_branch
          %171 = sbr.rel (%p169) target = $region16
        $region15: #{tpu_custom_call.1} parent=11 // pred_region
          %s173 = ssub.s32 8192, 8192
          %174 = vsyncadd [#allocation6], %s173
          %s175 = sshll.u32 [#allocation5], 4
          %s176 = int_to_ptr.vmem [resolvable:$true] %s175
          %181 = dma.hbm_to_vmem [thread:$0]  %s1, 8192, %s176, [#allocation6], 128, 128, 8
        $region16: #{tpu_custom_call.1} parent=11 // pred_fallthru
          _
        // Predicated region
        $region17: #{tpu_custom_call.1} parent=11 // pred_check
          %p182 = pneg %p86
        $region18: #{tpu_custom_call.1} parent=11 // pred_check_branch
          %184 = sbr.rel (%p182) target = $region20
        $region19: #{tpu_custom_call.1} parent=11 // pred_region
          _
        $region20: #{tpu_custom_call.1} parent=11 // pred_fallthru
          _
        // Predicated region
        $region21: #{tpu_custom_call.1} parent=11 // pred_check
          %p185 = pneg %p107
        $region22: #{tpu_custom_call.1} parent=11 // pred_check_branch
          %187 = sbr.rel (%p185) target = $region24
        $region23: #{tpu_custom_call.1} parent=11 // pred_region
          %s189 = ssub.s32 6144, 6144
          %190 = vsyncadd [#allocation6], %s189
          %s191 = sshll.u32 [#allocation7], 4
          %s192 = int_to_ptr.vmem [resolvable:$true] %s191
          %197 = dma.hbm_to_vmem [thread:$0]  %s3, 6144, %s192, [#allocation6], 128, 128, 8
        $region24: #{tpu_custom_call.1} parent=11 // pred_fallthru
          _
        // Predicated region
        $region25: #{tpu_custom_call.1} parent=11 // pred_check
          %p198 = pneg %p128
        $region26: #{tpu_custom_call.1} parent=11 // pred_check_branch
          %200 = sbr.rel (%p198) target = $region28
        $region27: #{tpu_custom_call.1} parent=11 // pred_region
          _
        $region28: #{tpu_custom_call.1} parent=11 // pred_fallthru
          _
      $region12: #{tpu_custom_call.1} parent=5 // pred_fallthru
        _
      %p201 = scmp.lt.s32.totalorder %s18, 2
      // Predicated region
      $region29: #{tpu_custom_call.1} parent=5 // pred_check
        %p202 = pneg %p201
      $region30: #{tpu_custom_call.1} parent=5 // pred_check_branch
        %204 = sbr.rel (%p202) target = $region32
      $region31: #{tpu_custom_call.1} parent=5 // pred_region
        // Predicated region
        $region33: #{tpu_custom_call.1} parent=31 // pred_check
          %p205 = pneg %p38
        $region34: #{tpu_custom_call.1} parent=31 // pred_check_branch
          %207 = sbr.rel (%p205) target = $region36
        $region35: #{tpu_custom_call.1} parent=31 // pred_region
          %s208 = sand.u32 %s28, 1
          %s209 = scalar_lea.sflag [#allocation3], %s208
          %s210 = sand.u32 %s28, 1
          %s211 = smul.addr %s210, 64
          %s212 = scalar_lea.vmem [#allocation2], %s211
          %s213 = smul.u32 8, %s18
          %s215 = ssub.s32 1024, 1024
          %216 = vsyncadd %s209, %s215
          %s217 = smul.addr %s213, 128
          %s218 = scalar_lea.hbm %s0, %s217
          %s219 = sshll.u32 %s212, 4
          %s220 = int_to_ptr.vmem [resolvable:$true] %s219
          %225 = dma.hbm_to_vmem [thread:$0]  %s218, 1024, %s220, %s209, 128, 128, 8
        $region36: #{tpu_custom_call.1} parent=31 // pred_fallthru
          _
      $region32: #{tpu_custom_call.1} parent=5 // pred_fallthru
        _
      %p226 = scmp.le.s32.totalorder 1, %s18
      %p227 = scmp.lt.s32.totalorder %s18, 3
      %p228 = pnand %p226, %p227
      %p229 = pneg %p228
      // Predicated region
      $region37: #{tpu_custom_call.1} parent=5 // pred_check
        _
      $region38: #{tpu_custom_call.1} parent=5 // pred_check_branch
        %231 = sbr.rel (%p228) target = $region40
      $region39: #{tpu_custom_call.1} parent=5 // pred_region
        %s232 = ssub.s32 %s18, 1
        %s233 = sand.u32 %s31, 1
        %s234 = scalar_lea.sflag [#allocation3], %s233
        %s235 = sand.u32 %s31, 1
        %s236 = smul.addr %s235, 64
        %s237 = scalar_lea.vmem [#allocation2], %s236
        // Predicated region
        $region41: #{tpu_custom_call.1} parent=39 // pred_check
          %p238 = pneg %p44
        $region42: #{tpu_custom_call.1} parent=39 // pred_check_branch
          %240 = sbr.rel (%p238) target = $region44
        $region43: #{tpu_custom_call.1} parent=39 // pred_region
          %241 = dma.done %s234, 1024
        $region44: #{tpu_custom_call.1} parent=39 // pred_fallthru
          _
        // Predicated region
        $region45: #{tpu_custom_call.1} parent=39 // pred_check
          %p242 = pneg %p65
        $region46: #{tpu_custom_call.1} parent=39 // pred_check_branch
          %244 = sbr.rel (%p242) target = $region48
        $region47: #{tpu_custom_call.1} parent=39 // pred_region
          %245 = dma.done [#allocation6], 8192
        $region48: #{tpu_custom_call.1} parent=39 // pred_fallthru
          _
        // Predicated region
        $region49: #{tpu_custom_call.1} parent=39 // pred_check
          %p246 = pneg %p107
        $region50: #{tpu_custom_call.1} parent=39 // pred_check_branch
          %248 = sbr.rel (%p246) target = $region52
        $region51: #{tpu_custom_call.1} parent=39 // pred_region
          %249 = dma.done [#allocation6], 6144
        $region52: #{tpu_custom_call.1} parent=39 // pred_fallthru
          _
        %s250 = sand.u32 %s31, 1
        %s251 = scalar_lea.sflag [#allocation3], %s250
        %s252 = sand.u32 %s31, 1
        %s253 = smul.addr %s252, 64
        %s254 = scalar_lea.vmem [#allocation2], %s253
        %p255 = pneg %p44
        %p256 = pneg %p41
        %p257 = pneg %p65
        %p258 = pneg %p62
        %p259 = pneg %p86
        %p260 = pneg %p83
        %p261 = pneg %p107
        %p262 = pneg %p104
        %p263 = pneg %p128
        %p264 = pneg %p125
        %p265 = pneg %p154
        %p266 = pneg %p151
        %s267 = sand.u32 %s141, 1
        %s268 = scalar_lea.sflag [#allocation4], %s267
        %s269 = sand.u32 %s141, 1
        %s270 = smul.addr %s269, 8
        %s271 = scalar_lea.vmem [#allocation8], %s270
        %s272 = smul.u32 8, %s23
        %v273 = vld [vmem:[%s237] sm:$0xff]
        %v274 = vld [vmem:[%s237 + $0x8] sm:$0xff]
        %v275 = vld [vmem:[%s237 + $0x10] sm:$0xff]
        %v276 = vld [vmem:[%s237 + $0x18] sm:$0xff]
        %v277 = vld [vmem:[%s237 + $0x20] sm:$0xff]
        %v278 = vld [vmem:[%s237 + $0x28] sm:$0xff]
        %v279 = vld [vmem:[%s237 + $0x30] sm:$0xff]
        %v280 = vld [vmem:[%s237 + $0x38] sm:$0xff]
        %v281 = vld [vmem:[#allocation5] sm:$0xff]
        %v282 = vld [vmem:[#allocation5 + $0x8] sm:$0xff]
        %v283 = vld [vmem:[#allocation5 + $0x10] sm:$0xff]
        %v284 = vld [vmem:[#allocation5 + $0x18] sm:$0xff]
        %v285 = vld [vmem:[#allocation5 + $0x20] sm:$0xff]
        %v286 = vld [vmem:[#allocation5 + $0x28] sm:$0xff]
        %v287 = vld [vmem:[#allocation5 + $0x30] sm:$0xff]
        %v288 = vld [vmem:[#allocation5 + $0x38] sm:$0xff]
        %v289 = vld [vmem:[#allocation5 + $0x40] sm:$0xff]
        %v290 = vld [vmem:[#allocation5 + $0x48] sm:$0xff]
        %v291 = vld [vmem:[#allocation5 + $0x50] sm:$0xff]
        %v292 = vld [vmem:[#allocation5 + $0x58] sm:$0xff]
        %v293 = vld [vmem:[#allocation5 + $0x60] sm:$0xff]
        %v294 = vld [vmem:[#allocation5 + $0x68] sm:$0xff]
        %v295 = vld [vmem:[#allocation5 + $0x70] sm:$0xff]
        %v296 = vld [vmem:[#allocation5 + $0x78] sm:$0xff]
        %v297 = vld [vmem:[%s2] sm:$0x1]
        %v299 = vlaneseq
        %v300 = vshrl.u32 %v299, 7
        %v301 = vsub.s32 0, %v300
        %v302 = vrot.slane %v297, %v301
        %304 = vmatprep.subr.mxu0 0.0
        %305 = vmatpush1.msra.mxu0 %v281
        %306 = vmatprep.subr.mxu0 0.0
        %307 = vmatpush1.msra.mxu0 %v282
        %308 = vmatprep.subr.mxu0 0.0
        %309 = vmatpush1.msra.mxu0 %v283
        %310 = vmatprep.subr.mxu0 0.0
        %311 = vmatpush1.msra.mxu0 %v284
        %312 = vmatprep.subr.mxu0 0.0
        %313 = vmatpush1.msra.mxu0 %v285
        %314 = vmatprep.subr.mxu0 0.0
        %315 = vmatpush1.msra.mxu0 %v286
        %316 = vmatprep.subr.mxu0 0.0
        %317 = vmatpush1.msra.mxu0 %v287
        %318 = vmatprep.subr.mxu0 0.0
        %319 = vmatpush1.msra.mxu0 %v288
        %320 = vmatprep.subr.mxu0 0.0
        %321 = vmatpush1.msra.mxu0 %v289
        %322 = vmatprep.subr.mxu0 0.0
        %323 = vmatpush1.msra.mxu0 %v290
        %324 = vmatprep.subr.mxu0 0.0
        %325 = vmatpush1.msra.mxu0 %v291
        %326 = vmatprep.subr.mxu0 0.0
        %327 = vmatpush1.msra.mxu0 %v292
        %328 = vmatprep.subr.mxu0 0.0
        %329 = vmatpush1.msra.mxu0 %v293
        %330 = vmatprep.subr.mxu0 0.0
        %331 = vmatpush1.msra.mxu0 %v294
        %332 = vmatprep.subr.mxu0 0.0
        %333 = vmatpush1.msra.mxu0 %v295
        %334 = vmatprep.subr.mxu0 0.0
        %335 = vmatpush1.msra.mxu0 %v296
        %336 = vmatprep.subr.mxu0 0.0
        %337 = vmatpush1.msra.mxu0 0.0
        %338 = vmatprep.subr.mxu0 0.0
        %339 = vmatpush1.msra.mxu0 0.0
        %340 = vmatprep.subr.mxu0 0.0
        %341 = vmatpush1.msra.mxu0 0.0
        %342 = vmatprep.subr.mxu0 0.0
        %343 = vmatpush1.msra.mxu0 0.0
        %344 = vmatprep.subr.mxu0 0.0
        %345 = vmatpush1.msra.mxu0 0.0
        %346 = vmatprep.subr.mxu0 0.0
        %347 = vmatpush1.msra.mxu0 0.0
        %348 = vmatprep.subr.mxu0 0.0
        %349 = vmatpush1.msra.mxu0 0.0
        %350 = vmatprep.subr.mxu0 0.0
        %351 = vmatpush1.msra.mxu0 0.0
        %352 = vmatprep.subr.mxu0 0.0
        %353 = vmatpush1.msra.mxu0 0.0
        %354 = vmatprep.subr.mxu0 0.0
        %355 = vmatpush1.msra.mxu0 0.0
        %356 = vmatprep.subr.mxu0 0.0
        %357 = vmatpush1.msra.mxu0 0.0
        %358 = vmatprep.subr.mxu0 0.0
        %359 = vmatpush1.msra.mxu0 0.0
        %360 = vmatprep.subr.mxu0 0.0
        %361 = vmatpush1.msra.mxu0 0.0
        %362 = vmatprep.subr.mxu0 0.0
        %363 = vmatpush1.msra.mxu0 0.0
        %364 = vmatprep.subr.mxu0 0.0
        %365 = vmatpush1.msra.mxu0 0.0
        %366 = vmatprep.subr.mxu0 0.0
        %367 = vmatpush1.msra.mxu0 0.0
        %368 = vmatprep.mubr.f32.mxu0 0.0
        %369 = vmatmul.mubr.f32.gmra.mrb[0].mxu0 %v273
        %v370 = vpop.f32.mrb[0].mxu0
        %v371 = vadd.f32 %v302, %v370
        %v372 = vpop.f32.mrb[0].mxu0
        %373 = vmatprep.mubr.f32.mxu0 0.0
        %374 = vmatmul.mubr.f32.gmra.mrb[0].mxu0 %v274
        %v375 = vpop.f32.mrb[0].mxu0
        %v376 = vadd.f32 %v302, %v375
        %v377 = vpop.f32.mrb[0].mxu0
        %378 = vmatprep.mubr.f32.mxu0 0.0
        %379 = vmatmul.mubr.f32.gmra.mrb[0].mxu0 %v275
        %v380 = vpop.f32.mrb[0].mxu0
        %v381 = vadd.f32 %v302, %v380
        %v382 = vpop.f32.mrb[0].mxu0
        %383 = vmatprep.mubr.f32.mxu0 0.0
        %384 = vmatmul.mubr.f32.gmra.mrb[0].mxu0 %v276
        %v385 = vpop.f32.mrb[0].mxu0
        %v386 = vadd.f32 %v302, %v385
        %v387 = vpop.f32.mrb[0].mxu0
        %388 = vmatprep.mubr.f32.mxu0 0.0
        %389 = vmatmul.mubr.f32.gmra.mrb[0].mxu0 %v277
        %v390 = vpop.f32.mrb[0].mxu0
        %v391 = vadd.f32 %v302, %v390
        %v392 = vpop.f32.mrb[0].mxu0
        %393 = vmatprep.mubr.f32.mxu0 0.0
        %394 = vmatmul.mubr.f32.gmra.mrb[0].mxu0 %v278
        %v395 = vpop.f32.mrb[0].mxu0
        %v396 = vadd.f32 %v302, %v395
        %v397 = vpop.f32.mrb[0].mxu0
        %398 = vmatprep.mubr.f32.mxu0 0.0
        %399 = vmatmul.mubr.f32.gmra.mrb[0].mxu0 %v279
        %v400 = vpop.f32.mrb[0].mxu0
        %v401 = vadd.f32 %v302, %v400
        %v402 = vpop.f32.mrb[0].mxu0
        %403 = vmatprep.mubr.f32.mxu0 0.0
        %404 = vmatmul.mubr.f32.gmra.mrb[0].mxu0 %v280
        %v405 = vpop.f32.mrb[0].mxu0
        %v406 = vadd.f32 %v302, %v405
        %v407 = vpop.f32.mrb[0].mxu0
        %408 = vdwg.mxu0
        %v409 = vrot.slane %v371, 4
        %v410 = vmax.f32 %v371, %v409
        %v411 = vrot.slane %v410, 2
        %v412 = vmax.f32 %v410, %v411
        %v413 = vrot.slane %v412, 1
        %v414 = vmax.f32 %v412, %v413
        %v415 = vrot.slane %v376, 4
        %v416 = vmax.f32 %v376, %v415
        %v417 = vrot.slane %v416, 2
        %v418 = vmax.f32 %v416, %v417
        %v419 = vrot.slane %v418, 1
        %v420 = vmax.f32 %v418, %v419
        %v421 = vrot.slane %v381, 4
        %v422 = vmax.f32 %v381, %v421
        %v423 = vrot.slane %v422, 2
        %v424 = vmax.f32 %v422, %v423
        %v425 = vrot.slane %v424, 1
        %v426 = vmax.f32 %v424, %v425
        %v427 = vrot.slane %v386, 4
        %v428 = vmax.f32 %v386, %v427
        %v429 = vrot.slane %v428, 2
        %v430 = vmax.f32 %v428, %v429
        %v431 = vrot.slane %v430, 1
        %v432 = vmax.f32 %v430, %v431
        %v433 = vrot.slane %v391, 4
        %v434 = vmax.f32 %v391, %v433
        %v435 = vrot.slane %v434, 2
        %v436 = vmax.f32 %v434, %v435
        %v437 = vrot.slane %v436, 1
        %v438 = vmax.f32 %v436, %v437
        %v439 = vrot.slane %v396, 4
        %v440 = vmax.f32 %v396, %v439
        %v441 = vrot.slane %v440, 2
        %v442 = vmax.f32 %v440, %v441
        %v443 = vrot.slane %v442, 1
        %v444 = vmax.f32 %v442, %v443
        %v445 = vrot.slane %v401, 4
        %v446 = vmax.f32 %v401, %v445
        %v447 = vrot.slane %v446, 2
        %v448 = vmax.f32 %v446, %v447
        %v449 = vrot.slane %v448, 1
        %v450 = vmax.f32 %v448, %v449
        %v451 = vrot.slane %v406, 4
        %v452 = vmax.f32 %v406, %v451
        %v453 = vrot.slane %v452, 2
        %v454 = vmax.f32 %v452, %v453
        %v455 = vrot.slane %v454, 1
        %v456 = vmax.f32 %v454, %v455
        %v457 = vsub.f32 %v414, %v371
        %v458 = vsub.f32 %v420, %v376
        %v459 = vsub.f32 %v426, %v381
        %v460 = vsub.f32 %v432, %v386
        %v461 = vsub.f32 %v438, %v391
        %v462 = vsub.f32 %v444, %v396
        %v463 = vsub.f32 %v450, %v401
        %v464 = vsub.f32 %v456, %v406
        %v465 = vmax.f32 %v457, 0.0
        %v466 = vmax.f32 %v458, 0.0
        %v467 = vmax.f32 %v459, 0.0
        %v468 = vmax.f32 %v460, 0.0
        %v469 = vmax.f32 %v461, 0.0
        %v470 = vmax.f32 %v462, 0.0
        %v471 = vmax.f32 %v463, 0.0
        %v472 = vmax.f32 %v464, 0.0
        %s473 = scalar_lea.vmem [#allocation5], 128
        %v474 = vld [vmem:[%s473] sm:$0xff]
        %v475 = vld [vmem:[%s473 + $0x8] sm:$0xff]
        %v476 = vld [vmem:[%s473 + $0x10] sm:$0xff]
        %v477 = vld [vmem:[%s473 + $0x18] sm:$0xff]
        %v478 = vld [vmem:[%s473 + $0x20] sm:$0xff]
        %v479 = vld [vmem:[%s473 + $0x28] sm:$0xff]
        %v480 = vld [vmem:[%s473 + $0x30] sm:$0xff]
        %v481 = vld [vmem:[%s473 + $0x38] sm:$0xff]
        %v482 = vld [vmem:[%s473 + $0x40] sm:$0xff]
        %v483 = vld [vmem:[%s473 + $0x48] sm:$0xff]
        %v484 = vld [vmem:[%s473 + $0x50] sm:$0xff]
        %v485 = vld [vmem:[%s473 + $0x58] sm:$0xff]
        %v486 = vld [vmem:[%s473 + $0x60] sm:$0xff]
        %v487 = vld [vmem:[%s473 + $0x68] sm:$0xff]
        %v488 = vld [vmem:[%s473 + $0x70] sm:$0xff]
        %v489 = vld [vmem:[%s473 + $0x78] sm:$0xff]
        %s490 = scalar_lea.vmem %s2, 1
        %v491 = vld [vmem:[%s490] sm:$0x1]
        %v493 = vlaneseq
        %v494 = vshrl.u32 %v493, 7
        %v495 = vsub.s32 0, %v494
        %v496 = vrot.slane %v491, %v495
        %498 = vmatprep.subr.mxu0 0.0
        %499 = vmatpush1.msra.mxu0 %v474
        %500 = vmatprep.subr.mxu0 0.0
        %501 = vmatpush1.msra.mxu0 %v475
        %502 = vmatprep.subr.mxu0 0.0
        %503 = vmatpush1.msra.mxu0 %v476
        %504 = vmatprep.subr.mxu0 0.0
        %505 = vmatpush1.msra.mxu0 %v477
        %506 = vmatprep.subr.mxu0 0.0
        %507 = vmatpush1.msra.mxu0 %v478
        %508 = vmatprep.subr.mxu0 0.0
        %509 = vmatpush1.msra.mxu0 %v479
        %510 = vmatprep.subr.mxu0 0.0
        %511 = vmatpush1.msra.mxu0 %v480
        %512 = vmatprep.subr.mxu0 0.0
        %513 = vmatpush1.msra.mxu0 %v481
        %514 = vmatprep.subr.mxu0 0.0
        %515 = vmatpush1.msra.mxu0 %v482
        %516 = vmatprep.subr.mxu0 0.0
        %517 = vmatpush1.msra.mxu0 %v483
        %518 = vmatprep.subr.mxu0 0.0
        %519 = vmatpush1.msra.mxu0 %v484
        %520 = vmatprep.subr.mxu0 0.0
        %521 = vmatpush1.msra.mxu0 %v485
        %522 = vmatprep.subr.mxu0 0.0
        %523 = vmatpush1.msra.mxu0 %v486
        %524 = vmatprep.subr.mxu0 0.0
        %525 = vmatpush1.msra.mxu0 %v487
        %526 = vmatprep.subr.mxu0 0.0
        %527 = vmatpush1.msra.mxu0 %v488
        %528 = vmatprep.subr.mxu0 0.0
        %529 = vmatpush1.msra.mxu0 %v489
        %530 = vmatprep.subr.mxu0 0.0
        %531 = vmatpush1.msra.mxu0 0.0
        %532 = vmatprep.subr.mxu0 0.0
        %533 = vmatpush1.msra.mxu0 0.0
        %534 = vmatprep.subr.mxu0 0.0
        %535 = vmatpush1.msra.mxu0 0.0
        %536 = vmatprep.subr.mxu0 0.0
        %537 = vmatpush1.msra.mxu0 0.0
        %538 = vmatprep.subr.mxu0 0.0
        %539 = vmatpush1.msra.mxu0 0.0
        %540 = vmatprep.subr.mxu0 0.0
        %541 = vmatpush1.msra.mxu0 0.0
        %542 = vmatprep.subr.mxu0 0.0
        %543 = vmatpush1.msra.mxu0 0.0
        %544 = vmatprep.subr.mxu0 0.0
        %545 = vmatpush1.msra.mxu0 0.0
        %546 = vmatprep.subr.mxu0 0.0
        %547 = vmatpush1.msra.mxu0 0.0
        %548 = vmatprep.subr.mxu0 0.0
        %549 = vmatpush1.msra.mxu0 0.0
        %550 = vmatprep.subr.mxu0 0.0
        %551 = vmatpush1.msra.mxu0 0.0
        %552 = vmatprep.subr.mxu0 0.0
        %553 = vmatpush1.msra.mxu0 0.0
        %554 = vmatprep.subr.mxu0 0.0
        %555 = vmatpush1.msra.mxu0 0.0
        %556 = vmatprep.subr.mxu0 0.0
        %557 = vmatpush1.msra.mxu0 0.0
        %558 = vmatprep.subr.mxu0 0.0
        %559 = vmatpush1.msra.mxu0 0.0
        %560 = vmatprep.subr.mxu0 0.0
        %561 = vmatpush1.msra.mxu0 0.0
        %562 = vmatprep.mubr.f32.mxu0 0.0
        %563 = vmatmul.mubr.f32.gmra.mrb[0].mxu0 %v465
        %v564 = vpop.f32.mrb[0].mxu0
        %v565 = vadd.f32 %v496, %v564
        %v566 = vpop.f32.mrb[0].mxu0
        %567 = vmatprep.mubr.f32.mxu0 0.0
        %568 = vmatmul.mubr.f32.gmra.mrb[0].mxu0 %v466
        %v569 = vpop.f32.mrb[0].mxu0
        %v570 = vadd.f32 %v496, %v569
        %v571 = vpop.f32.mrb[0].mxu0
        %572 = vmatprep.mubr.f32.mxu0 0.0
        %573 = vmatmul.mubr.f32.gmra.mrb[0].mxu0 %v467
        %v574 = vpop.f32.mrb[0].mxu0
        %v575 = vadd.f32 %v496, %v574
        %v576 = vpop.f32.mrb[0].mxu0
        %577 = vmatprep.mubr.f32.mxu0 0.0
        %578 = vmatmul.mubr.f32.gmra.mrb[0].mxu0 %v468
        %v579 = vpop.f32.mrb[0].mxu0
        %v580 = vadd.f32 %v496, %v579
        %v581 = vpop.f32.mrb[0].mxu0
        %582 = vmatprep.mubr.f32.mxu0 0.0
        %583 = vmatmul.mubr.f32.gmra.mrb[0].mxu0 %v469
        %v584 = vpop.f32.mrb[0].mxu0
        %v585 = vadd.f32 %v496, %v584
        %v586 = vpop.f32.mrb[0].mxu0
        %587 = vmatprep.mubr.f32.mxu0 0.0
        %588 = vmatmul.mubr.f32.gmra.mrb[0].mxu0 %v470
        %v589 = vpop.f32.mrb[0].mxu0
        %v590 = vadd.f32 %v496, %v589
        %v591 = vpop.f32.mrb[0].mxu0
        %592 = vmatprep.mubr.f32.mxu0 0.0
        %593 = vmatmul.mubr.f32.gmra.mrb[0].mxu0 %v471
        %v594 = vpop.f32.mrb[0].mxu0
        %v595 = vadd.f32 %v496, %v594
        %v596 = vpop.f32.mrb[0].mxu0
        %597 = vmatprep.mubr.f32.mxu0 0.0
        %598 = vmatmul.mubr.f32.gmra.mrb[0].mxu0 %v472
        %v599 = vpop.f32.mrb[0].mxu0
        %v600 = vadd.f32 %v496, %v599
        %v601 = vpop.f32.mrb[0].mxu0
        %602 = vdwg.mxu0
        %v603 = vrot.slane %v565, 4
        %v604 = vmax.f32 %v565, %v603
        %v605 = vrot.slane %v604, 2
        %v606 = vmax.f32 %v604, %v605
        %v607 = vrot.slane %v606, 1
        %v608 = vmax.f32 %v606, %v607
        %v609 = vrot.slane %v570, 4
        %v610 = vmax.f32 %v570, %v609
        %v611 = vrot.slane %v610, 2
        %v612 = vmax.f32 %v610, %v611
        %v613 = vrot.slane %v612, 1
        %v614 = vmax.f32 %v612, %v613
        %v615 = vrot.slane %v575, 4
        %v616 = vmax.f32 %v575, %v615
        %v617 = vrot.slane %v616, 2
        %v618 = vmax.f32 %v616, %v617
        %v619 = vrot.slane %v618, 1
        %v620 = vmax.f32 %v618, %v619
        %v621 = vrot.slane %v580, 4
        %v622 = vmax.f32 %v580, %v621
        %v623 = vrot.slane %v622, 2
        %v624 = vmax.f32 %v622, %v623
        %v625 = vrot.slane %v624, 1
        %v626 = vmax.f32 %v624, %v625
        %v627 = vrot.slane %v585, 4
        %v628 = vmax.f32 %v585, %v627
        %v629 = vrot.slane %v628, 2
        %v630 = vmax.f32 %v628, %v629
        %v631 = vrot.slane %v630, 1
        %v632 = vmax.f32 %v630, %v631
        %v633 = vrot.slane %v590, 4
        %v634 = vmax.f32 %v590, %v633
        %v635 = vrot.slane %v634, 2
        %v636 = vmax.f32 %v634, %v635
        %v637 = vrot.slane %v636, 1
        %v638 = vmax.f32 %v636, %v637
        %v639 = vrot.slane %v595, 4
        %v640 = vmax.f32 %v595, %v639
        %v641 = vrot.slane %v640, 2
        %v642 = vmax.f32 %v640, %v641
        %v643 = vrot.slane %v642, 1
        %v644 = vmax.f32 %v642, %v643
        %v645 = vrot.slane %v600, 4
        %v646 = vmax.f32 %v600, %v645
        %v647 = vrot.slane %v646, 2
        %v648 = vmax.f32 %v646, %v647
        %v649 = vrot.slane %v648, 1
        %v650 = vmax.f32 %v648, %v649
        %v651 = vsub.f32 %v608, %v565
        %v652 = vsub.f32 %v614, %v570
        %v653 = vsub.f32 %v620, %v575
        %v654 = vsub.f32 %v626, %v580
        %v655 = vsub.f32 %v632, %v585
        %v656 = vsub.f32 %v638, %v590
        %v657 = vsub.f32 %v644, %v595
        %v658 = vsub.f32 %v650, %v600
        %v659 = vmax.f32 %v651, 0.0
        %v660 = vmax.f32 %v652, 0.0
        %v661 = vmax.f32 %v653, 0.0
        %v662 = vmax.f32 %v654, 0.0
        %v663 = vmax.f32 %v655, 0.0
        %v664 = vmax.f32 %v656, 0.0
        %v665 = vmax.f32 %v657, 0.0
        %v666 = vmax.f32 %v658, 0.0
        %s667 = scalar_lea.vmem [#allocation5], 256
        %v668 = vld [vmem:[%s667] sm:$0xff]
        %v669 = vld [vmem:[%s667 + $0x8] sm:$0xff]
        %v670 = vld [vmem:[%s667 + $0x10] sm:$0xff]
        %v671 = vld [vmem:[%s667 + $0x18] sm:$0xff]
        %v672 = vld [vmem:[%s667 + $0x20] sm:$0xff]
        %v673 = vld [vmem:[%s667 + $0x28] sm:$0xff]
        %v674 = vld [vmem:[%s667 + $0x30] sm:$0xff]
        %v675 = vld [vmem:[%s667 + $0x38] sm:$0xff]
        %v676 = vld [vmem:[%s667 + $0x40] sm:$0xff]
        %v677 = vld [vmem:[%s667 + $0x48] sm:$0xff]
        %v678 = vld [vmem:[%s667 + $0x50] sm:$0xff]
        %v679 = vld [vmem:[%s667 + $0x58] sm:$0xff]
        %v680 = vld [vmem:[%s667 + $0x60] sm:$0xff]
        %v681 = vld [vmem:[%s667 + $0x68] sm:$0xff]
        %v682 = vld [vmem:[%s667 + $0x70] sm:$0xff]
        %v683 = vld [vmem:[%s667 + $0x78] sm:$0xff]
        %s684 = scalar_lea.vmem %s2, 2
        %v685 = vld [vmem:[%s684] sm:$0x1]
        %v687 = vlaneseq
        %v688 = vshrl.u32 %v687, 7
        %v689 = vsub.s32 0, %v688
        %v690 = vrot.slane %v685, %v689
        %692 = vmatprep.subr.mxu0 0.0
        %693 = vmatpush1.msra.mxu0 %v668
        %694 = vmatprep.subr.mxu0 0.0
        %695 = vmatpush1.msra.mxu0 %v669
        %696 = vmatprep.subr.mxu0 0.0
        %697 = vmatpush1.msra.mxu0 %v670
        %698 = vmatprep.subr.mxu0 0.0
        %699 = vmatpush1.msra.mxu0 %v671
        %700 = vmatprep.subr.mxu0 0.0
        %701 = vmatpush1.msra.mxu0 %v672
        %702 = vmatprep.subr.mxu0 0.0
        %703 = vmatpush1.msra.mxu0 %v673
        %704 = vmatprep.subr.mxu0 0.0
        %705 = vmatpush1.msra.mxu0 %v674
        %706 = vmatprep.subr.mxu0 0.0
        %707 = vmatpush1.msra.mxu0 %v675
        %708 = vmatprep.subr.mxu0 0.0
        %709 = vmatpush1.msra.mxu0 %v676
        %710 = vmatprep.subr.mxu0 0.0
        %711 = vmatpush1.msra.mxu0 %v677
        %712 = vmatprep.subr.mxu0 0.0
        %713 = vmatpush1.msra.mxu0 %v678
        %714 = vmatprep.subr.mxu0 0.0
        %715 = vmatpush1.msra.mxu0 %v679
        %716 = vmatprep.subr.mxu0 0.0
        %717 = vmatpush1.msra.mxu0 %v680
        %718 = vmatprep.subr.mxu0 0.0
        %719 = vmatpush1.msra.mxu0 %v681
        %720 = vmatprep.subr.mxu0 0.0
        %721 = vmatpush1.msra.mxu0 %v682
        %722 = vmatprep.subr.mxu0 0.0
        %723 = vmatpush1.msra.mxu0 %v683
        %724 = vmatprep.subr.mxu0 0.0
        %725 = vmatpush1.msra.mxu0 0.0
        %726 = vmatprep.subr.mxu0 0.0
        %727 = vmatpush1.msra.mxu0 0.0
        %728 = vmatprep.subr.mxu0 0.0
        %729 = vmatpush1.msra.mxu0 0.0
        %730 = vmatprep.subr.mxu0 0.0
        %731 = vmatpush1.msra.mxu0 0.0
        %732 = vmatprep.subr.mxu0 0.0
        %733 = vmatpush1.msra.mxu0 0.0
        %734 = vmatprep.subr.mxu0 0.0
        %735 = vmatpush1.msra.mxu0 0.0
        %736 = vmatprep.subr.mxu0 0.0
        %737 = vmatpush1.msra.mxu0 0.0
        %738 = vmatprep.subr.mxu0 0.0
        %739 = vmatpush1.msra.mxu0 0.0
        %740 = vmatprep.subr.mxu0 0.0
        %741 = vmatpush1.msra.mxu0 0.0
        %742 = vmatprep.subr.mxu0 0.0
        %743 = vmatpush1.msra.mxu0 0.0
        %744 = vmatprep.subr.mxu0 0.0
        %745 = vmatpush1.msra.mxu0 0.0
        %746 = vmatprep.subr.mxu0 0.0
        %747 = vmatpush1.msra.mxu0 0.0
        %748 = vmatprep.subr.mxu0 0.0
        %749 = vmatpush1.msra.mxu0 0.0
        %750 = vmatprep.subr.mxu0 0.0
        %751 = vmatpush1.msra.mxu0 0.0
        %752 = vmatprep.subr.mxu0 0.0
        %753 = vmatpush1.msra.mxu0 0.0
        %754 = vmatprep.subr.mxu0 0.0
        %755 = vmatpush1.msra.mxu0 0.0
        %756 = vmatprep.mubr.f32.mxu0 0.0
        %757 = vmatmul.mubr.f32.gmra.mrb[0].mxu0 %v659
        %v758 = vpop.f32.mrb[0].mxu0
        %v759 = vadd.f32 %v690, %v758
        %v760 = vpop.f32.mrb[0].mxu0
        %761 = vmatprep.mubr.f32.mxu0 0.0
        %762 = vmatmul.mubr.f32.gmra.mrb[0].mxu0 %v660
        %v763 = vpop.f32.mrb[0].mxu0
        %v764 = vadd.f32 %v690, %v763
        %v765 = vpop.f32.mrb[0].mxu0
        %766 = vmatprep.mubr.f32.mxu0 0.0
        %767 = vmatmul.mubr.f32.gmra.mrb[0].mxu0 %v661
        %v768 = vpop.f32.mrb[0].mxu0
        %v769 = vadd.f32 %v690, %v768
        %v770 = vpop.f32.mrb[0].mxu0
        %771 = vmatprep.mubr.f32.mxu0 0.0
        %772 = vmatmul.mubr.f32.gmra.mrb[0].mxu0 %v662
        %v773 = vpop.f32.mrb[0].mxu0
        %v774 = vadd.f32 %v690, %v773
        %v775 = vpop.f32.mrb[0].mxu0
        %776 = vmatprep.mubr.f32.mxu0 0.0
        %777 = vmatmul.mubr.f32.gmra.mrb[0].mxu0 %v663
        %v778 = vpop.f32.mrb[0].mxu0
        %v779 = vadd.f32 %v690, %v778
        %v780 = vpop.f32.mrb[0].mxu0
        %781 = vmatprep.mubr.f32.mxu0 0.0
        %782 = vmatmul.mubr.f32.gmra.mrb[0].mxu0 %v664
        %v783 = vpop.f32.mrb[0].mxu0
        %v784 = vadd.f32 %v690, %v783
        %v785 = vpop.f32.mrb[0].mxu0
        %786 = vmatprep.mubr.f32.mxu0 0.0
        %787 = vmatmul.mubr.f32.gmra.mrb[0].mxu0 %v665
        %v788 = vpop.f32.mrb[0].mxu0
        %v789 = vadd.f32 %v690, %v788
        %v790 = vpop.f32.mrb[0].mxu0
        %791 = vmatprep.mubr.f32.mxu0 0.0
        %792 = vmatmul.mubr.f32.gmra.mrb[0].mxu0 %v666
        %v793 = vpop.f32.mrb[0].mxu0
        %v794 = vadd.f32 %v690, %v793
        %v795 = vpop.f32.mrb[0].mxu0
        %796 = vdwg.mxu0
        %v797 = vrot.slane %v759, 4
        %v798 = vmax.f32 %v759, %v797
        %v799 = vrot.slane %v798, 2
        %v800 = vmax.f32 %v798, %v799
        %v801 = vrot.slane %v800, 1
        %v802 = vmax.f32 %v800, %v801
        %v803 = vrot.slane %v764, 4
        %v804 = vmax.f32 %v764, %v803
        %v805 = vrot.slane %v804, 2
        %v806 = vmax.f32 %v804, %v805
        %v807 = vrot.slane %v806, 1
        %v808 = vmax.f32 %v806, %v807
        %v809 = vrot.slane %v769, 4
        %v810 = vmax.f32 %v769, %v809
        %v811 = vrot.slane %v810, 2
        %v812 = vmax.f32 %v810, %v811
        %v813 = vrot.slane %v812, 1
        %v814 = vmax.f32 %v812, %v813
        %v815 = vrot.slane %v774, 4
        %v816 = vmax.f32 %v774, %v815
        %v817 = vrot.slane %v816, 2
        %v818 = vmax.f32 %v816, %v817
        %v819 = vrot.slane %v818, 1
        %v820 = vmax.f32 %v818, %v819
        %v821 = vrot.slane %v779, 4
        %v822 = vmax.f32 %v779, %v821
        %v823 = vrot.slane %v822, 2
        %v824 = vmax.f32 %v822, %v823
        %v825 = vrot.slane %v824, 1
        %v826 = vmax.f32 %v824, %v825
        %v827 = vrot.slane %v784, 4
        %v828 = vmax.f32 %v784, %v827
        %v829 = vrot.slane %v828, 2
        %v830 = vmax.f32 %v828, %v829
        %v831 = vrot.slane %v830, 1
        %v832 = vmax.f32 %v830, %v831
        %v833 = vrot.slane %v789, 4
        %v834 = vmax.f32 %v789, %v833
        %v835 = vrot.slane %v834, 2
        %v836 = vmax.f32 %v834, %v835
        %v837 = vrot.slane %v836, 1
        %v838 = vmax.f32 %v836, %v837
        %v839 = vrot.slane %v794, 4
        %v840 = vmax.f32 %v794, %v839
        %v841 = vrot.slane %v840, 2
        %v842 = vmax.f32 %v840, %v841
        %v843 = vrot.slane %v842, 1
        %v844 = vmax.f32 %v842, %v843
        %v845 = vsub.f32 %v802, %v759
        %v846 = vsub.f32 %v808, %v764
        %v847 = vsub.f32 %v814, %v769
        %v848 = vsub.f32 %v820, %v774
        %v849 = vsub.f32 %v826, %v779
        %v850 = vsub.f32 %v832, %v784
        %v851 = vsub.f32 %v838, %v789
        %v852 = vsub.f32 %v844, %v794
        %v853 = vmax.f32 %v845, 0.0
        %v854 = vmax.f32 %v846, 0.0
        %v855 = vmax.f32 %v847, 0.0
        %v856 = vmax.f32 %v848, 0.0
        %v857 = vmax.f32 %v849, 0.0
        %v858 = vmax.f32 %v850, 0.0
        %v859 = vmax.f32 %v851, 0.0
        %v860 = vmax.f32 %v852, 0.0
        %s861 = scalar_lea.vmem [#allocation5], 384
        %v862 = vld [vmem:[%s861] sm:$0xff]
        %v863 = vld [vmem:[%s861 + $0x8] sm:$0xff]
        %v864 = vld [vmem:[%s861 + $0x10] sm:$0xff]
        %v865 = vld [vmem:[%s861 + $0x18] sm:$0xff]
        %v866 = vld [vmem:[%s861 + $0x20] sm:$0xff]
        %v867 = vld [vmem:[%s861 + $0x28] sm:$0xff]
        %v868 = vld [vmem:[%s861 + $0x30] sm:$0xff]
        %v869 = vld [vmem:[%s861 + $0x38] sm:$0xff]
        %v870 = vld [vmem:[%s861 + $0x40] sm:$0xff]
        %v871 = vld [vmem:[%s861 + $0x48] sm:$0xff]
        %v872 = vld [vmem:[%s861 + $0x50] sm:$0xff]
        %v873 = vld [vmem:[%s861 + $0x58] sm:$0xff]
        %v874 = vld [vmem:[%s861 + $0x60] sm:$0xff]
        %v875 = vld [vmem:[%s861 + $0x68] sm:$0xff]
        %v876 = vld [vmem:[%s861 + $0x70] sm:$0xff]
        %v877 = vld [vmem:[%s861 + $0x78] sm:$0xff]
        %s878 = scalar_lea.vmem %s2, 3
        %v879 = vld [vmem:[%s878] sm:$0x1]
        %v881 = vlaneseq
        %v882 = vshrl.u32 %v881, 7
        %v883 = vsub.s32 0, %v882
        %v884 = vrot.slane %v879, %v883
        %886 = vmatprep.subr.mxu0 0.0
        %887 = vmatpush1.msra.mxu0 %v862
        %888 = vmatprep.subr.mxu0 0.0
        %889 = vmatpush1.msra.mxu0 %v863
        %890 = vmatprep.subr.mxu0 0.0
        %891 = vmatpush1.msra.mxu0 %v864
        %892 = vmatprep.subr.mxu0 0.0
        %893 = vmatpush1.msra.mxu0 %v865
        %894 = vmatprep.subr.mxu0 0.0
        %895 = vmatpush1.msra.mxu0 %v866
        %896 = vmatprep.subr.mxu0 0.0
        %897 = vmatpush1.msra.mxu0 %v867
        %898 = vmatprep.subr.mxu0 0.0
        %899 = vmatpush1.msra.mxu0 %v868
        %900 = vmatprep.subr.mxu0 0.0
        %901 = vmatpush1.msra.mxu0 %v869
        %902 = vmatprep.subr.mxu0 0.0
        %903 = vmatpush1.msra.mxu0 %v870
        %904 = vmatprep.subr.mxu0 0.0
        %905 = vmatpush1.msra.mxu0 %v871
        %906 = vmatprep.subr.mxu0 0.0
        %907 = vmatpush1.msra.mxu0 %v872
        %908 = vmatprep.subr.mxu0 0.0
        %909 = vmatpush1.msra.mxu0 %v873
        %910 = vmatprep.subr.mxu0 0.0
        %911 = vmatpush1.msra.mxu0 %v874
        %912 = vmatprep.subr.mxu0 0.0
        %913 = vmatpush1.msra.mxu0 %v875
        %914 = vmatprep.subr.mxu0 0.0
        %915 = vmatpush1.msra.mxu0 %v876
        %916 = vmatprep.subr.mxu0 0.0
        %917 = vmatpush1.msra.mxu0 %v877
        %918 = vmatprep.subr.mxu0 0.0
        %919 = vmatpush1.msra.mxu0 0.0
        %920 = vmatprep.subr.mxu0 0.0
        %921 = vmatpush1.msra.mxu0 0.0
        %922 = vmatprep.subr.mxu0 0.0
        %923 = vmatpush1.msra.mxu0 0.0
        %924 = vmatprep.subr.mxu0 0.0
        %925 = vmatpush1.msra.mxu0 0.0
        %926 = vmatprep.subr.mxu0 0.0
        %927 = vmatpush1.msra.mxu0 0.0
        %928 = vmatprep.subr.mxu0 0.0
        %929 = vmatpush1.msra.mxu0 0.0
        %930 = vmatprep.subr.mxu0 0.0
        %931 = vmatpush1.msra.mxu0 0.0
        %932 = vmatprep.subr.mxu0 0.0
        %933 = vmatpush1.msra.mxu0 0.0
        %934 = vmatprep.subr.mxu0 0.0
        %935 = vmatpush1.msra.mxu0 0.0
        %936 = vmatprep.subr.mxu0 0.0
        %937 = vmatpush1.msra.mxu0 0.0
        %938 = vmatprep.subr.mxu0 0.0
        %939 = vmatpush1.msra.mxu0 0.0
        %940 = vmatprep.subr.mxu0 0.0
        %941 = vmatpush1.msra.mxu0 0.0
        %942 = vmatprep.subr.mxu0 0.0
        %943 = vmatpush1.msra.mxu0 0.0
        %944 = vmatprep.subr.mxu0 0.0
        %945 = vmatpush1.msra.mxu0 0.0
        %946 = vmatprep.subr.mxu0 0.0
        %947 = vmatpush1.msra.mxu0 0.0
        %948 = vmatprep.subr.mxu0 0.0
        %949 = vmatpush1.msra.mxu0 0.0
        %950 = vmatprep.mubr.f32.mxu0 0.0
        %951 = vmatmul.mubr.f32.gmra.mrb[0].mxu0 %v853
        %v952 = vpop.f32.mrb[0].mxu0
        %v953 = vadd.f32 %v884, %v952
        %v954 = vpop.f32.mrb[0].mxu0
        %955 = vmatprep.mubr.f32.mxu0 0.0
        %956 = vmatmul.mubr.f32.gmra.mrb[0].mxu0 %v854
        %v957 = vpop.f32.mrb[0].mxu0
        %v958 = vadd.f32 %v884, %v957
        %v959 = vpop.f32.mrb[0].mxu0
        %960 = vmatprep.mubr.f32.mxu0 0.0
        %961 = vmatmul.mubr.f32.gmra.mrb[0].mxu0 %v855
        %v962 = vpop.f32.mrb[0].mxu0
        %v963 = vadd.f32 %v884, %v962
        %v964 = vpop.f32.mrb[0].mxu0
        %965 = vmatprep.mubr.f32.mxu0 0.0
        %966 = vmatmul.mubr.f32.gmra.mrb[0].mxu0 %v856
        %v967 = vpop.f32.mrb[0].mxu0
        %v968 = vadd.f32 %v884, %v967
        %v969 = vpop.f32.mrb[0].mxu0
        %970 = vmatprep.mubr.f32.mxu0 0.0
        %971 = vmatmul.mubr.f32.gmra.mrb[0].mxu0 %v857
        %v972 = vpop.f32.mrb[0].mxu0
        %v973 = vadd.f32 %v884, %v972
        %v974 = vpop.f32.mrb[0].mxu0
        %975 = vmatprep.mubr.f32.mxu0 0.0
        %976 = vmatmul.mubr.f32.gmra.mrb[0].mxu0 %v858
        %v977 = vpop.f32.mrb[0].mxu0
        %v978 = vadd.f32 %v884, %v977
        %v979 = vpop.f32.mrb[0].mxu0
        %980 = vmatprep.mubr.f32.mxu0 0.0
        %981 = vmatmul.mubr.f32.gmra.mrb[0].mxu0 %v859
        %v982 = vpop.f32.mrb[0].mxu0
        %v983 = vadd.f32 %v884, %v982
        %v984 = vpop.f32.mrb[0].mxu0
        %985 = vmatprep.mubr.f32.mxu0 0.0
        %986 = vmatmul.mubr.f32.gmra.mrb[0].mxu0 %v860
        %v987 = vpop.f32.mrb[0].mxu0
        %v988 = vadd.f32 %v884, %v987
        %v989 = vpop.f32.mrb[0].mxu0
        %990 = vdwg.mxu0
        %v991 = vrot.slane %v953, 4
        %v992 = vmax.f32 %v953, %v991
        %v993 = vrot.slane %v992, 2
        %v994 = vmax.f32 %v992, %v993
        %v995 = vrot.slane %v994, 1
        %v996 = vmax.f32 %v994, %v995
        %v997 = vrot.slane %v958, 4
        %v998 = vmax.f32 %v958, %v997
        %v999 = vrot.slane %v998, 2
        %v1000 = vmax.f32 %v998, %v999
        %v1001 = vrot.slane %v1000, 1
        %v1002 = vmax.f32 %v1000, %v1001
        %v1003 = vrot.slane %v963, 4
        %v1004 = vmax.f32 %v963, %v1003
        %v1005 = vrot.slane %v1004, 2
        %v1006 = vmax.f32 %v1004, %v1005
        %v1007 = vrot.slane %v1006, 1
        %v1008 = vmax.f32 %v1006, %v1007
        %v1009 = vrot.slane %v968, 4
        %v1010 = vmax.f32 %v968, %v1009
        %v1011 = vrot.slane %v1010, 2
        %v1012 = vmax.f32 %v1010, %v1011
        %v1013 = vrot.slane %v1012, 1
        %v1014 = vmax.f32 %v1012, %v1013
        %v1015 = vrot.slane %v973, 4
        %v1016 = vmax.f32 %v973, %v1015
        %v1017 = vrot.slane %v1016, 2
        %v1018 = vmax.f32 %v1016, %v1017
        %v1019 = vrot.slane %v1018, 1
        %v1020 = vmax.f32 %v1018, %v1019
        %v1021 = vrot.slane %v978, 4
        %v1022 = vmax.f32 %v978, %v1021
        %v1023 = vrot.slane %v1022, 2
        %v1024 = vmax.f32 %v1022, %v1023
        %v1025 = vrot.slane %v1024, 1
        %v1026 = vmax.f32 %v1024, %v1025
        %v1027 = vrot.slane %v983, 4
        %v1028 = vmax.f32 %v983, %v1027
        %v1029 = vrot.slane %v1028, 2
        %v1030 = vmax.f32 %v1028, %v1029
        %v1031 = vrot.slane %v1030, 1
        %v1032 = vmax.f32 %v1030, %v1031
        %v1033 = vrot.slane %v988, 4
        %v1034 = vmax.f32 %v988, %v1033
        %v1035 = vrot.slane %v1034, 2
        %v1036 = vmax.f32 %v1034, %v1035
        %v1037 = vrot.slane %v1036, 1
        %v1038 = vmax.f32 %v1036, %v1037
        %v1039 = vsub.f32 %v996, %v953
        %v1040 = vsub.f32 %v1002, %v958
        %v1041 = vsub.f32 %v1008, %v963
        %v1042 = vsub.f32 %v1014, %v968
        %v1043 = vsub.f32 %v1020, %v973
        %v1044 = vsub.f32 %v1026, %v978
        %v1045 = vsub.f32 %v1032, %v983
        %v1046 = vsub.f32 %v1038, %v988
        %v1047 = vmax.f32 %v1039, 0.0
        %v1048 = vmax.f32 %v1040, 0.0
        %v1049 = vmax.f32 %v1041, 0.0
        %v1050 = vmax.f32 %v1042, 0.0
        %v1051 = vmax.f32 %v1043, 0.0
        %v1052 = vmax.f32 %v1044, 0.0
        %v1053 = vmax.f32 %v1045, 0.0
        %v1054 = vmax.f32 %v1046, 0.0
        %v1055 = vrot.slane %v1047, 4
        %v1056 = vmax.f32 %v1047, %v1055
        %v1057 = vrot.slane %v1056, 2
        %v1058 = vmax.f32 %v1056, %v1057
        %v1059 = vrot.slane %v1058, 1
        %v1060 = vmax.f32 %v1058, %v1059
        %v1061 = vrot.slane %v1048, 4
        %v1062 = vmax.f32 %v1048, %v1061
        %v1063 = vrot.slane %v1062, 2
        %v1064 = vmax.f32 %v1062, %v1063
        %v1065 = vrot.slane %v1064, 1
        %v1066 = vmax.f32 %v1064, %v1065
        %v1067 = vrot.slane %v1049, 4
        %v1068 = vmax.f32 %v1049, %v1067
        %v1069 = vrot.slane %v1068, 2
        %v1070 = vmax.f32 %v1068, %v1069
        %v1071 = vrot.slane %v1070, 1
        %v1072 = vmax.f32 %v1070, %v1071
        %v1073 = vrot.slane %v1050, 4
        %v1074 = vmax.f32 %v1050, %v1073
        %v1075 = vrot.slane %v1074, 2
        %v1076 = vmax.f32 %v1074, %v1075
        %v1077 = vrot.slane %v1076, 1
        %v1078 = vmax.f32 %v1076, %v1077
        %v1079 = vrot.slane %v1051, 4
        %v1080 = vmax.f32 %v1051, %v1079
        %v1081 = vrot.slane %v1080, 2
        %v1082 = vmax.f32 %v1080, %v1081
        %v1083 = vrot.slane %v1082, 1
        %v1084 = vmax.f32 %v1082, %v1083
        %v1085 = vrot.slane %v1052, 4
        %v1086 = vmax.f32 %v1052, %v1085
        %v1087 = vrot.slane %v1086, 2
        %v1088 = vmax.f32 %v1086, %v1087
        %v1089 = vrot.slane %v1088, 1
        %v1090 = vmax.f32 %v1088, %v1089
        %v1091 = vrot.slane %v1053, 4
        %v1092 = vmax.f32 %v1053, %v1091
        %v1093 = vrot.slane %v1092, 2
        %v1094 = vmax.f32 %v1092, %v1093
        %v1095 = vrot.slane %v1094, 1
        %v1096 = vmax.f32 %v1094, %v1095
        %v1097 = vrot.slane %v1054, 4
        %v1098 = vmax.f32 %v1054, %v1097
        %v1099 = vrot.slane %v1098, 2
        %v1100 = vmax.f32 %v1098, %v1099
        %v1101 = vrot.slane %v1100, 1
        %v1102 = vmax.f32 %v1100, %v1101
        %v1103 = vld [vmem:[#allocation7] sm:$0xff]
        %v1104 = vld [vmem:[#allocation7 + $0x8] sm:$0xff]
        %v1105 = vld [vmem:[#allocation7 + $0x10] sm:$0xff]
        %v1106 = vld [vmem:[#allocation7 + $0x18] sm:$0xff]
        %v1107 = vld [vmem:[#allocation7 + $0x20] sm:$0xff]
        %v1108 = vld [vmem:[#allocation7 + $0x28] sm:$0xff]
        %v1109 = vld [vmem:[#allocation7 + $0x30] sm:$0xff]
        %v1110 = vld [vmem:[#allocation7 + $0x38] sm:$0xff]
        %v1111 = vld [vmem:[#allocation7 + $0x40] sm:$0xff]
        %v1112 = vld [vmem:[#allocation7 + $0x48] sm:$0xff]
        %v1113 = vld [vmem:[#allocation7 + $0x50] sm:$0xff]
        %v1114 = vld [vmem:[#allocation7 + $0x58] sm:$0xff]
        %v1115 = vld [vmem:[#allocation7 + $0x60] sm:$0xff]
        %v1116 = vld [vmem:[#allocation7 + $0x68] sm:$0xff]
        %v1117 = vld [vmem:[#allocation7 + $0x70] sm:$0xff]
        %v1118 = vld [vmem:[#allocation7 + $0x78] sm:$0xff]
        %v1119 = vld [vmem:[%s4] sm:$0x1]
        %v1121 = vlaneseq
        %v1122 = vshrl.u32 %v1121, 7
        %v1123 = vsub.s32 0, %v1122
        %v1124 = vrot.slane %v1119, %v1123
        %vm1134 = vcmask 1041409
        %v1135 = vsel %vm1134, %v1066, %v1060
        %vm1136 = vcmask 1042434
        %v1137 = vsel %vm1136, %v1072, %v1135
        %vm1138 = vcmask 1043459
        %v1139 = vsel %vm1138, %v1078, %v1137
        %vm1140 = vcmask 1044484
        %v1141 = vsel %vm1140, %v1084, %v1139
        %vm1142 = vcmask 1045509
        %v1143 = vsel %vm1142, %v1090, %v1141
        %vm1144 = vcmask 1046534
        %v1145 = vsel %vm1144, %v1096, %v1143
        %vm1146 = vcmask 1047559
        %v1147 = vsel %vm1146, %v1102, %v1145
        %1149 = vmatprep.subr.mxu0 0.0
        %1150 = vmatpush1.msra.mxu0 %v1103
        %1151 = vmatprep.subr.mxu0 0.0
        %1152 = vmatpush1.msra.mxu0 %v1104
        %1153 = vmatprep.subr.mxu0 0.0
        %1154 = vmatpush1.msra.mxu0 %v1105
        %1155 = vmatprep.subr.mxu0 0.0
        %1156 = vmatpush1.msra.mxu0 %v1106
        %1157 = vmatprep.subr.mxu0 0.0
        %1158 = vmatpush1.msra.mxu0 %v1107
        %1159 = vmatprep.subr.mxu0 0.0
        %1160 = vmatpush1.msra.mxu0 %v1108
        %1161 = vmatprep.subr.mxu0 0.0
        %1162 = vmatpush1.msra.mxu0 %v1109
        %1163 = vmatprep.subr.mxu0 0.0
        %1164 = vmatpush1.msra.mxu0 %v1110
        %1165 = vmatprep.subr.mxu0 0.0
        %1166 = vmatpush1.msra.mxu0 %v1111
        %1167 = vmatprep.subr.mxu0 0.0
        %1168 = vmatpush1.msra.mxu0 %v1112
        %1169 = vmatprep.subr.mxu0 0.0
        %1170 = vmatpush1.msra.mxu0 %v1113
        %1171 = vmatprep.subr.mxu0 0.0
        %1172 = vmatpush1.msra.mxu0 %v1114
        %1173 = vmatprep.subr.mxu0 0.0
        %1174 = vmatpush1.msra.mxu0 %v1115
        %1175 = vmatprep.subr.mxu0 0.0
        %1176 = vmatpush1.msra.mxu0 %v1116
        %1177 = vmatprep.subr.mxu0 0.0
        %1178 = vmatpush1.msra.mxu0 %v1117
        %1179 = vmatprep.subr.mxu0 0.0
        %1180 = vmatpush1.msra.mxu0 %v1118
        %1181 = vmatprep.subr.mxu0 0.0
        %1182 = vmatpush1.msra.mxu0 0.0
        %1183 = vmatprep.subr.mxu0 0.0
        %1184 = vmatpush1.msra.mxu0 0.0
        %1185 = vmatprep.subr.mxu0 0.0
        %1186 = vmatpush1.msra.mxu0 0.0
        %1187 = vmatprep.subr.mxu0 0.0
        %1188 = vmatpush1.msra.mxu0 0.0
        %1189 = vmatprep.subr.mxu0 0.0
        %1190 = vmatpush1.msra.mxu0 0.0
        %1191 = vmatprep.subr.mxu0 0.0
        %1192 = vmatpush1.msra.mxu0 0.0
        %1193 = vmatprep.subr.mxu0 0.0
        %1194 = vmatpush1.msra.mxu0 0.0
        %1195 = vmatprep.subr.mxu0 0.0
        %1196 = vmatpush1.msra.mxu0 0.0
        %1197 = vmatprep.subr.mxu0 0.0
        %1198 = vmatpush1.msra.mxu0 0.0
        %1199 = vmatprep.subr.mxu0 0.0
        %1200 = vmatpush1.msra.mxu0 0.0
        %1201 = vmatprep.subr.mxu0 0.0
        %1202 = vmatpush1.msra.mxu0 0.0
        %1203 = vmatprep.subr.mxu0 0.0
        %1204 = vmatpush1.msra.mxu0 0.0
        %1205 = vmatprep.subr.mxu0 0.0
        %1206 = vmatpush1.msra.mxu0 0.0
        %1207 = vmatprep.subr.mxu0 0.0
        %1208 = vmatpush1.msra.mxu0 0.0
        %1209 = vmatprep.subr.mxu0 0.0
        %1210 = vmatpush1.msra.mxu0 0.0
        %1211 = vmatprep.subr.mxu0 0.0
        %1212 = vmatpush1.msra.mxu0 0.0
        %1213 = vmatprep.mubr.f32.mxu0 0.0
        %1214 = vmatmul.mubr.f32.gmra.mrb[0].mxu0 %v1147
        %v1215 = vpop.f32.mrb[0].mxu0
        %v1216 = vadd.f32 %v1124, %v1215
        %v1217 = vpop.f32.mrb[0].mxu0
        %1218 = vdwg.mxu0
        %v1219 = vmax.f32 %v1216, 0.0
        %s1220 = scalar_lea.vmem [#allocation7], 128
        %v1221 = vld [vmem:[%s1220] sm:$0xff]
        %v1222 = vld [vmem:[%s1220 + $0x8] sm:$0xff]
        %v1223 = vld [vmem:[%s1220 + $0x10] sm:$0xff]
        %v1224 = vld [vmem:[%s1220 + $0x18] sm:$0xff]
        %v1225 = vld [vmem:[%s1220 + $0x20] sm:$0xff]
        %v1226 = vld [vmem:[%s1220 + $0x28] sm:$0xff]
        %v1227 = vld [vmem:[%s1220 + $0x30] sm:$0xff]
        %v1228 = vld [vmem:[%s1220 + $0x38] sm:$0xff]
        %v1229 = vld [vmem:[%s1220 + $0x40] sm:$0xff]
        %v1230 = vld [vmem:[%s1220 + $0x48] sm:$0xff]
        %v1231 = vld [vmem:[%s1220 + $0x50] sm:$0xff]
        %v1232 = vld [vmem:[%s1220 + $0x58] sm:$0xff]
        %v1233 = vld [vmem:[%s1220 + $0x60] sm:$0xff]
        %v1234 = vld [vmem:[%s1220 + $0x68] sm:$0xff]
        %v1235 = vld [vmem:[%s1220 + $0x70] sm:$0xff]
        %v1236 = vld [vmem:[%s1220 + $0x78] sm:$0xff]
        %s1237 = scalar_lea.vmem %s4, 1
        %v1238 = vld [vmem:[%s1237] sm:$0x1]
        %v1240 = vlaneseq
        %v1241 = vshrl.u32 %v1240, 7
        %v1242 = vsub.s32 0, %v1241
        %v1243 = vrot.slane %v1238, %v1242
        %1245 = vmatprep.subr.mxu0 0.0
        %1246 = vmatpush1.msra.mxu0 %v1221
        %1247 = vmatprep.subr.mxu0 0.0
        %1248 = vmatpush1.msra.mxu0 %v1222
        %1249 = vmatprep.subr.mxu0 0.0
        %1250 = vmatpush1.msra.mxu0 %v1223
        %1251 = vmatprep.subr.mxu0 0.0
        %1252 = vmatpush1.msra.mxu0 %v1224
        %1253 = vmatprep.subr.mxu0 0.0
        %1254 = vmatpush1.msra.mxu0 %v1225
        %1255 = vmatprep.subr.mxu0 0.0
        %1256 = vmatpush1.msra.mxu0 %v1226
        %1257 = vmatprep.subr.mxu0 0.0
        %1258 = vmatpush1.msra.mxu0 %v1227
        %1259 = vmatprep.subr.mxu0 0.0
        %1260 = vmatpush1.msra.mxu0 %v1228
        %1261 = vmatprep.subr.mxu0 0.0
        %1262 = vmatpush1.msra.mxu0 %v1229
        %1263 = vmatprep.subr.mxu0 0.0
        %1264 = vmatpush1.msra.mxu0 %v1230
        %1265 = vmatprep.subr.mxu0 0.0
        %1266 = vmatpush1.msra.mxu0 %v1231
        %1267 = vmatprep.subr.mxu0 0.0
        %1268 = vmatpush1.msra.mxu0 %v1232
        %1269 = vmatprep.subr.mxu0 0.0
        %1270 = vmatpush1.msra.mxu0 %v1233
        %1271 = vmatprep.subr.mxu0 0.0
        %1272 = vmatpush1.msra.mxu0 %v1234
        %1273 = vmatprep.subr.mxu0 0.0
        %1274 = vmatpush1.msra.mxu0 %v1235
        %1275 = vmatprep.subr.mxu0 0.0
        %1276 = vmatpush1.msra.mxu0 %v1236
        %1277 = vmatprep.subr.mxu0 0.0
        %1278 = vmatpush1.msra.mxu0 0.0
        %1279 = vmatprep.subr.mxu0 0.0
        %1280 = vmatpush1.msra.mxu0 0.0
        %1281 = vmatprep.subr.mxu0 0.0
        %1282 = vmatpush1.msra.mxu0 0.0
        %1283 = vmatprep.subr.mxu0 0.0
        %1284 = vmatpush1.msra.mxu0 0.0
        %1285 = vmatprep.subr.mxu0 0.0
        %1286 = vmatpush1.msra.mxu0 0.0
        %1287 = vmatprep.subr.mxu0 0.0
        %1288 = vmatpush1.msra.mxu0 0.0
        %1289 = vmatprep.subr.mxu0 0.0
        %1290 = vmatpush1.msra.mxu0 0.0
        %1291 = vmatprep.subr.mxu0 0.0
        %1292 = vmatpush1.msra.mxu0 0.0
        %1293 = vmatprep.subr.mxu0 0.0
        %1294 = vmatpush1.msra.mxu0 0.0
        %1295 = vmatprep.subr.mxu0 0.0
        %1296 = vmatpush1.msra.mxu0 0.0
        %1297 = vmatprep.subr.mxu0 0.0
        %1298 = vmatpush1.msra.mxu0 0.0
        %1299 = vmatprep.subr.mxu0 0.0
        %1300 = vmatpush1.msra.mxu0 0.0
        %1301 = vmatprep.subr.mxu0 0.0
        %1302 = vmatpush1.msra.mxu0 0.0
        %1303 = vmatprep.subr.mxu0 0.0
        %1304 = vmatpush1.msra.mxu0 0.0
        %1305 = vmatprep.subr.mxu0 0.0
        %1306 = vmatpush1.msra.mxu0 0.0
        %1307 = vmatprep.subr.mxu0 0.0
        %1308 = vmatpush1.msra.mxu0 0.0
        %1309 = vmatprep.mubr.f32.mxu0 0.0
        %1310 = vmatmul.mubr.f32.gmra.mrb[0].mxu0 %v1219
        %v1311 = vpop.f32.mrb[0].mxu0
        %v1312 = vadd.f32 %v1243, %v1311
        %v1313 = vpop.f32.mrb[0].mxu0
        %1314 = vdwg.mxu0
        %v1315 = vmax.f32 %v1312, 0.0
        %s1316 = scalar_lea.vmem [#allocation7], 256
        %v1317 = vld [vmem:[%s1316] sm:$0xff]
        %v1318 = vld [vmem:[%s1316 + $0x8] sm:$0xff]
        %v1319 = vld [vmem:[%s1316 + $0x10] sm:$0xff]
        %v1320 = vld [vmem:[%s1316 + $0x18] sm:$0xff]
        %v1321 = vld [vmem:[%s1316 + $0x20] sm:$0xff]
        %v1322 = vld [vmem:[%s1316 + $0x28] sm:$0xff]
        %v1323 = vld [vmem:[%s1316 + $0x30] sm:$0xff]
        %v1324 = vld [vmem:[%s1316 + $0x38] sm:$0xff]
        %v1325 = vld [vmem:[%s1316 + $0x40] sm:$0xff]
        %v1326 = vld [vmem:[%s1316 + $0x48] sm:$0xff]
        %v1327 = vld [vmem:[%s1316 + $0x50] sm:$0xff]
        %v1328 = vld [vmem:[%s1316 + $0x58] sm:$0xff]
        %v1329 = vld [vmem:[%s1316 + $0x60] sm:$0xff]
        %v1330 = vld [vmem:[%s1316 + $0x68] sm:$0xff]
        %v1331 = vld [vmem:[%s1316 + $0x70] sm:$0xff]
        %v1332 = vld [vmem:[%s1316 + $0x78] sm:$0xff]
        %s1333 = scalar_lea.vmem %s4, 2
        %v1334 = vld [vmem:[%s1333] sm:$0x1]
        %v1336 = vlaneseq
        %v1337 = vshrl.u32 %v1336, 7
        %v1338 = vsub.s32 0, %v1337
        %v1339 = vrot.slane %v1334, %v1338
        %1341 = vmatprep.subr.mxu0 0.0
        %1342 = vmatpush1.msra.mxu0 %v1317
        %1343 = vmatprep.subr.mxu0 0.0
        %1344 = vmatpush1.msra.mxu0 %v1318
        %1345 = vmatprep.subr.mxu0 0.0
        %1346 = vmatpush1.msra.mxu0 %v1319
        %1347 = vmatprep.subr.mxu0 0.0
        %1348 = vmatpush1.msra.mxu0 %v1320
        %1349 = vmatprep.subr.mxu0 0.0
        %1350 = vmatpush1.msra.mxu0 %v1321
        %1351 = vmatprep.subr.mxu0 0.0
        %1352 = vmatpush1.msra.mxu0 %v1322
        %1353 = vmatprep.subr.mxu0 0.0
        %1354 = vmatpush1.msra.mxu0 %v1323
        %1355 = vmatprep.subr.mxu0 0.0
        %1356 = vmatpush1.msra.mxu0 %v1324
        %1357 = vmatprep.subr.mxu0 0.0
        %1358 = vmatpush1.msra.mxu0 %v1325
        %1359 = vmatprep.subr.mxu0 0.0
        %1360 = vmatpush1.msra.mxu0 %v1326
        %1361 = vmatprep.subr.mxu0 0.0
        %1362 = vmatpush1.msra.mxu0 %v1327
        %1363 = vmatprep.subr.mxu0 0.0
        %1364 = vmatpush1.msra.mxu0 %v1328
        %1365 = vmatprep.subr.mxu0 0.0
        %1366 = vmatpush1.msra.mxu0 %v1329
        %1367 = vmatprep.subr.mxu0 0.0
        %1368 = vmatpush1.msra.mxu0 %v1330
        %1369 = vmatprep.subr.mxu0 0.0
        %1370 = vmatpush1.msra.mxu0 %v1331
        %1371 = vmatprep.subr.mxu0 0.0
        %1372 = vmatpush1.msra.mxu0 %v1332
        %1373 = vmatprep.subr.mxu0 0.0
        %1374 = vmatpush1.msra.mxu0 0.0
        %1375 = vmatprep.subr.mxu0 0.0
        %1376 = vmatpush1.msra.mxu0 0.0
        %1377 = vmatprep.subr.mxu0 0.0
        %1378 = vmatpush1.msra.mxu0 0.0
        %1379 = vmatprep.subr.mxu0 0.0
        %1380 = vmatpush1.msra.mxu0 0.0
        %1381 = vmatprep.subr.mxu0 0.0
        %1382 = vmatpush1.msra.mxu0 0.0
        %1383 = vmatprep.subr.mxu0 0.0
        %1384 = vmatpush1.msra.mxu0 0.0
        %1385 = vmatprep.subr.mxu0 0.0
        %1386 = vmatpush1.msra.mxu0 0.0
        %1387 = vmatprep.subr.mxu0 0.0
        %1388 = vmatpush1.msra.mxu0 0.0
        %1389 = vmatprep.subr.mxu0 0.0
        %1390 = vmatpush1.msra.mxu0 0.0
        %1391 = vmatprep.subr.mxu0 0.0
        %1392 = vmatpush1.msra.mxu0 0.0
        %1393 = vmatprep.subr.mxu0 0.0
        %1394 = vmatpush1.msra.mxu0 0.0
        %1395 = vmatprep.subr.mxu0 0.0
        %1396 = vmatpush1.msra.mxu0 0.0
        %1397 = vmatprep.subr.mxu0 0.0
        %1398 = vmatpush1.msra.mxu0 0.0
        %1399 = vmatprep.subr.mxu0 0.0
        %1400 = vmatpush1.msra.mxu0 0.0
        %1401 = vmatprep.subr.mxu0 0.0
        %1402 = vmatpush1.msra.mxu0 0.0
        %1403 = vmatprep.subr.mxu0 0.0
        %1404 = vmatpush1.msra.mxu0 0.0
        %1405 = vmatprep.mubr.f32.mxu0 0.0
        %1406 = vmatmul.mubr.f32.gmra.mrb[0].mxu0 %v1315
        %v1407 = vpop.f32.mrb[0].mxu0
        %v1408 = vadd.f32 %v1339, %v1407
        %v1409 = vpop.f32.mrb[0].mxu0
        %1410 = vdwg.mxu0
        %v1411 = vmax.f32 %v1408, 0.0
        %1412 = vst [vmem:[%s271] sm:$0xff] %v1411
        %s1413 = sand.u32 %s141, 1
        %s1414 = scalar_lea.sflag [#allocation4], %s1413
        %s1415 = sand.u32 %s141, 1
        %s1416 = smul.addr %s1415, 8
        %s1417 = scalar_lea.vmem [#allocation8], %s1416
        // Predicated region
        $region53: #{tpu_custom_call.1} parent=39 // pred_check
          %p1418 = pneg %p151
        $region54: #{tpu_custom_call.1} parent=39 // pred_check_branch
          %1420 = sbr.rel (%p1418) target = $region56
        $region55: #{tpu_custom_call.1} parent=39 // pred_region
          %s1422 = ssub.s32 128, 128
          %1423 = vsyncadd %s1414, %s1422
          %s1424 = smul.addr %s23, 128
          %s1425 = scalar_lea.hbm %s5, %s1424
          %s1427 = sshll.u32 %s1417, 4
          %s1428 = int_to_ptr.vmem [resolvable:$true] %s1427
          %1430 = dma.vmem_to_hbm [thread:$0]  %s1428, 128, %s1425, %s1414
        $region56: #{tpu_custom_call.1} parent=39 // pred_fallthru
          _
      $region40: #{tpu_custom_call.1} parent=5 // pred_fallthru
        _
      %p1431 = scmp.le.s32.totalorder 2, %s18
      // Predicated region
      $region57: #{tpu_custom_call.1} parent=5 // pred_check
        %p1432 = pneg %p1431
      $region58: #{tpu_custom_call.1} parent=5 // pred_check_branch
        %1434 = sbr.rel (%p1432) target = $region60
      $region59: #{tpu_custom_call.1} parent=5 // pred_region
        %s1435 = ssub.s32 %s18, 2
        // Predicated region
        $region61: #{tpu_custom_call.1} parent=59 // pred_check
          %p1436 = pneg %p157
        $region62: #{tpu_custom_call.1} parent=59 // pred_check_branch
          %1438 = sbr.rel (%p1436) target = $region64
        $region63: #{tpu_custom_call.1} parent=59 // pred_region
          %s1439 = sand.u32 %s142, 1
          %s1440 = scalar_lea.sflag [#allocation4], %s1439
          %s1441 = sand.u32 %s142, 1
          %s1442 = smul.addr %s1441, 8
          %s1443 = scalar_lea.vmem [#allocation8], %s1442
          %1444 = dma.done %s1440, 128
        $region64: #{tpu_custom_call.1} parent=59 // pred_fallthru
          _
      $region60: #{tpu_custom_call.1} parent=5 // pred_fallthru
        _
    $region6: #{tpu_custom_call.1} parent=1 // loop_footer
      %s22 = sadd.s32 1, %s18
    $region7: #{tpu_custom_call.1} parent=1 // loop_footer_branch
      %17 = sbr.rel target = $region3
    $region8: #{tpu_custom_call.1} parent=1 // loop_exit
      _
    %1445 = vsyncpa [#allocation3], 1
    %s1446 = scalar_lea.sflag [#allocation3], 1
    %1447 = vsyncpa %s1446, 1
    %1448 = vsyncpa [#allocation6], 1
    %1449 = vsyncpa [#allocation4], 1
    %s1450 = scalar_lea.sflag [#allocation4], 1
    %1451 = vsyncpa %s1450, 1

</llo_original>
